<compile_context>
chip_gen: v6e
topology: v6e:2x2x1
jax: 0.10.0
libtpu: 0.0.40
codegen_flags: <defaults>
</compile_context>

<pallas_src>
import math

import jax
import jax.numpy as jnp
import numpy as np
from jax import lax
from jax.experimental import pallas as pl
from jax.experimental.pallas import tpu as pltpu

# ---- small MPT-like config --------------------------------------------------
D_MODEL = 32
N_HEADS = 4
HEAD_DIM = D_MODEL // N_HEADS
BATCH = 4              # sequences per call (grid axis, "parallel")
SEQ = 8
CLIP_QKV = 8.0
QK_LN = True
ALIBI_BIAS_MAX = 8
LN_EPS = 1e-5
SCALE = HEAD_DIM ** -0.5


def get_alibi_slopes(total_num_heads: int, alibi_bias_max: int) -> jnp.ndarray:
    """Port of _get_alibi_slopes (deterministic, pure numpy)."""
    next_pow2 = 2 ** math.ceil(math.log2(total_num_heads))
    m = np.arange(1, next_pow2 + 1, dtype=np.float32) * (alibi_bias_max / next_pow2)
    slopes = 1.0 / np.power(2.0, m)
    if next_pow2 != total_num_heads:
        slopes = np.concatenate([slopes[1::2], slopes[::2]])[:total_num_heads]
    return jnp.asarray(slopes, dtype=jnp.float32)          # (H,)


# ---- fused Pallas kernel (one sequence per grid step) -----------------------
def mpt_attention_kernel(x_ref, wqkv_ref, qg_ref, qb_ref, kg_ref, kb_ref,
                         wout_ref, slopes_ref, o_ref, attn_scratch):
    T, D = x_ref.shape
    H, hd = N_HEADS, HEAD_DIM

    # --- QKV projection (bf16 in, f32 accumulate) + clip_qkv -----------------
    x = x_ref[...].astype(jnp.bfloat16)
    qkv = jnp.dot(x, wqkv_ref[...], preferred_element_type=jnp.float32)   # (T, 3D)
    qkv = jnp.clip(qkv, -CLIP_QKV, CLIP_QKV)
    q = qkv[:, 0:D]
    k = qkv[:, D:2 * D]
    v = qkv[:, 2 * D:3 * D]

    # --- qk_ln: LayerNorm over d_model (full D, spans all heads), in f32 -----
    def layer_norm(t, g, b):
        mu = jnp.mean(t, axis=-1, keepdims=True)
        var = jnp.mean(jnp.square(t - mu), axis=-1, keepdims=True)
        return (t - mu) * lax.rsqrt(var + LN_EPS) * g + b

    if QK_LN:
        q = layer_norm(q, qg_ref[...], qb_ref[...])
        k = layer_norm(k, kg_ref[...], kb_ref[...])

    # --- head-major staging: (T, D) -> (H, T, hd), bf16 for the MXU ----------
    # head_dim=8 is below one lane tile, so the split uses static lane slices
    # stacked along a new leading (batch) axis; all matmuls below are batched
    # over heads in a single contraction (no per-head MXU ops, no concat of
    # per-head outputs).
    def to_heads(t):
        return jnp.stack([t[:, h * hd:(h + 1) * hd] for h in range(H)], axis=0)

    q3 = to_heads(q).astype(jnp.bfloat16)                  # (H, T, hd)
    k3 = to_heads(k).astype(jnp.bfloat16)
    v3 = to_heads(v).astype(jnp.bfloat16)

    # --- scores for all heads in one batched MXU contraction -----------------
    s = jnp.einsum("hqd,hkd->hqk", q3, k3,
                   preferred_element_type=jnp.float32) * SCALE    # (H, T, T)

    # --- ALiBi + causal bias, built once (hoisted out of per-head work) ------
    qpos = lax.broadcasted_iota(jnp.int32, (T, T), 0)
    kpos = lax.broadcasted_iota(jnp.int32, (T, T), 1)
    dist = (kpos - qpos).astype(jnp.float32)               # bias[i, j] = j - i
    neg_mask = jnp.where(kpos <= qpos, 0.0, -1e30)         # single causal select
    # slopes live in SMEM; per-head scalar read, broadcast on the VALU.
    bias = jnp.stack([slopes_ref[h] * dist for h in range(H)], axis=0)
    s = s + (bias + neg_mask[None, :, :])                  # (H, T, T)

    # --- softmax (f32 elementwise; approx reciprocal uses the EUP slot) ------
    m = jnp.max(s, axis=-1, keepdims=True)
    p = jnp.exp(s - m)
    p = p * pl.reciprocal(jnp.sum(p, axis=-1, keepdims=True), approx=True)

    # --- attention output for all heads, written straight into (T, D) scratch
    attn3 = jnp.einsum("hqk,hkd->hqd", p.astype(jnp.bfloat16), v3,
                       preferred_element_type=jnp.float32)  # (H, T, hd)
    for h in range(H):
        attn_scratch[:, h * hd:(h + 1) * hd] = attn3[h]

    # --- output projection ----------------------------------------------------
    o_ref[...] = jnp.dot(attn_scratch[...].astype(jnp.bfloat16), wout_ref[...],
                         preferred_element_type=jnp.float32)

    # TODO(synk): for long sequences (esp. v7x 64 MiB VMEM) switch to a tiled-KV
    #             flash-style online softmax instead of materializing (T,T) scores.


def mpt_attention(hidden_states, wqkv_t, q_gamma, q_beta, k_gamma, k_beta,
                  wout_t, slopes):
    B, T, D = hidden_states.shape
    H = N_HEADS
    # One-time weight plumbing: bf16 copies for the MXU (in a real model the
    # weights are stored like this); LN params stay f32 for the VALU.
    wqkv_bf = wqkv_t.astype(jnp.bfloat16)
    wout_bf = wout_t.astype(jnp.bfloat16)
    slopes = slopes.reshape(H).astype(jnp.float32)

    # Weights get constant index_maps -> DMA'd once, resident across the grid.
    resident = lambda *shape: pl.BlockSpec(shape, lambda b: (0,) * len(shape))

    return pl.pallas_call(
        mpt_attention_kernel,
        out_shape=jax.ShapeDtypeStruct((B, T, D), jnp.float32),
        grid=(B,),
        in_specs=[
            pl.BlockSpec((None, T, D), lambda b: (b, 0, 0)),     # hidden (per seq)
            resident(D, 3 * D),                                  # Wqkv (resident)
            resident(1, D), resident(1, D),                      # q_ln gamma/beta
            resident(1, D), resident(1, D),                      # k_ln gamma/beta
            resident(D, D),                                      # out_proj
            pl.BlockSpec(memory_space=pltpu.MemorySpace.SMEM),   # alibi slopes
        ],
        out_specs=pl.BlockSpec((None, T, D), lambda b: (b, 0, 0)),
        scratch_shapes=[pltpu.VMEM((T, D), jnp.float32)],
        compiler_params=pltpu.CompilerParams(
            dimension_semantics=("parallel",)),
    )(hidden_states, wqkv_bf, q_gamma, q_beta, k_gamma, k_beta, wout_bf, slopes)


# ---- plain-JAX reference (f32, for numerical validation) --------------------
def mpt_attention_ref(x, wqkv_t, qg, qb, kg, kb, wout_t, slopes):
    H, hd = N_HEADS, HEAD_DIM

    def one(xb):
        T, D = xb.shape
        qkv = jnp.clip(xb @ wqkv_t, -CLIP_QKV, CLIP_QKV)
        q, k, v = qkv[:, :D], qkv[:, D:2 * D], qkv[:, 2 * D:]

        def ln(t, g, b):
            mu = jnp.mean(t, -1, keepdims=True)
            var = jnp.mean((t - mu) ** 2, -1, keepdims=True)
            return (t - mu) / jnp.sqrt(var + LN_EPS) * g + b

        q, k = ln(q, qg, qb), ln(k, kg, kb)
        qh = q.reshape(T, H, hd).transpose(1, 0, 2)
        kh = k.reshape(T, H, hd).transpose(1, 0, 2)
        vh = v.reshape(T, H, hd).transpose(1, 0, 2)
        s = jnp.einsum("hqd,hkd->hqk", qh, kh) * SCALE
        pos = jnp.arange(T)
        dist = (pos[None, :] - pos[:, None]).astype(jnp.float32)
        s = s + slopes.reshape(H, 1, 1) * dist[None]
        s = jnp.where((pos[None, :] <= pos[:, None])[None], s, -1e30)
        p = jax.nn.softmax(s, axis=-1)
        attn = jnp.einsum("hqk,hkd->qhd", p, vh).reshape(T, D)
        return attn @ wout_t

    return jax.vmap(one)(x)


# TODO(synk): vLLM's paged KV-cache decode path (k_cache/v_cache, InputMetadata)
#             is runtime plumbing of PagedAttention and is not modeled; this
#             kernel implements the prefill attention math (ALiBi + causal).

if __name__ == "__main__":
    key = jax.random.PRNGKey(0)
    ks = jax.random.split(key, 8)

    # Parameters (shapes from module __init__). torch stores Wqkv as
    # [3*d_model, d_model]; pre-transpose to [d_model, 3*d_model] for x @ W.
    wqkv = jax.random.normal(ks[0], (3 * D_MODEL, D_MODEL), jnp.float32) * (D_MODEL ** -0.5)
    wout = jax.random.normal(ks[1], (D_MODEL, D_MODEL), jnp.float32) * (D_MODEL ** -0.5)
    wqkv_t = wqkv.T
    wout_t = wout.T
    q_gamma = 1.0 + 0.1 * jax.random.normal(ks[2], (1, D_MODEL), jnp.float32)
    q_beta = 0.1 * jax.random.normal(ks[3], (1, D_MODEL), jnp.float32)
    k_gamma = 1.0 + 0.1 * jax.random.normal(ks[4], (1, D_MODEL), jnp.float32)
    k_beta = 0.1 * jax.random.normal(ks[5], (1, D_MODEL), jnp.float32)
    slopes = get_alibi_slopes(N_HEADS, ALIBI_BIAS_MAX)           # (H,)

    # Input: [B, T, d_model] (position_ids are unused by the module).
    hidden_states = jax.random.normal(ks[6], (BATCH, SEQ, D_MODEL), jnp.float32)

    out = mpt_attention(hidden_states, wqkv_t, q_gamma, q_beta, k_gamma, k_beta,
                        wout_t, slopes)
    out = jax.block_until_ready(out)

    ref = mpt_attention_ref(hidden_states, wqkv_t, q_gamma, q_beta, k_gamma, k_beta,
                            wout_t, slopes)
    # Kernel feeds the MXU bf16 inputs (f32 accumulate) per perf review, so the
    # tolerance vs. the pure-f32 reference is slightly looser than before.
    np.testing.assert_allclose(np.asarray(out), np.asarray(ref), rtol=5e-2, atol=5e-2)

    print("KERNEL_OK")
</pallas_src>

<mosaic_0001>
module attributes {stable_mosaic.version = 11 : i64} {
  func.func @mpt_attention_kernel(%arg0: i32, %arg1: memref<1x8x32xf32, #tpu.memory_space<vmem>>, %arg2: memref<32x96xbf16, #tpu.memory_space<vmem>>, %arg3: memref<1x32xf32, #tpu.memory_space<vmem>>, %arg4: memref<1x32xf32, #tpu.memory_space<vmem>>, %arg5: memref<1x32xf32, #tpu.memory_space<vmem>>, %arg6: memref<1x32xf32, #tpu.memory_space<vmem>>, %arg7: memref<32x32xbf16, #tpu.memory_space<vmem>>, %arg8: memref<4xf32, #tpu.memory_space<smem>>, %arg9: memref<1x8x32xf32, #tpu.memory_space<vmem>>, %arg10: memref<8x32xf32, #tpu.memory_space<vmem>>) attributes {dimension_semantics = [#tpu.dimension_semantics<parallel>], iteration_bounds = array<i64: 4>, scalar_prefetch = 0 : i64, scratch_operands = 1 : i64, tpu.core_type = #tpu.core_type<tc>, window_params = [{transform_indices = @transform_0, window_bounds = array<i64: 1, 8, 32>}, {pipeline_mode = #tpu.pipeline_mode<synchronous>, transform_indices = @transform_1, window_bounds = array<i64: 32, 96>}, {pipeline_mode = #tpu.pipeline_mode<synchronous>, transform_indices = @transform_2, window_bounds = array<i64: 1, 32>}, {pipeline_mode = #tpu.pipeline_mode<synchronous>, transform_indices = @transform_3, window_bounds = array<i64: 1, 32>}, {pipeline_mode = #tpu.pipeline_mode<synchronous>, transform_indices = @transform_4, window_bounds = array<i64: 1, 32>}, {pipeline_mode = #tpu.pipeline_mode<synchronous>, transform_indices = @transform_5, window_bounds = array<i64: 1, 32>}, {pipeline_mode = #tpu.pipeline_mode<synchronous>, transform_indices = @transform_6, window_bounds = array<i64: 32, 32>}, {transform_indices = @transform_7, window_bounds = array<i64: 4>}, {transform_indices = @transform_8, window_bounds = array<i64: 1, 8, 32>}]} {
    %c0 = arith.constant 0 : index
    %c0_0 = arith.constant 0 : index
    %c0_1 = arith.constant 0 : index
    %0 = vector.load %arg1[%c0, %c0_0, %c0_1] : memref<1x8x32xf32, #tpu.memory_space<vmem>>, vector<1x8x32xf32>
    %1 = vector.shape_cast %0 : vector<1x8x32xf32> to vector<8x32xf32>
    %2 = arith.truncf %1 : vector<8x32xf32> to vector<8x32xbf16>
    %c0_2 = arith.constant 0 : index
    %c0_3 = arith.constant 0 : index
    %3 = vector.load %arg2[%c0_2, %c0_3] : memref<32x96xbf16, #tpu.memory_space<vmem>>, vector<32x96xbf16>
    %cst = arith.constant dense<0.000000e+00> : vector<8x96xf32>
    %4 = tpu.matmul %2, %3, %cst {dimension_numbers = #tpu.dot_dimension_numbers<[1], [0], [0], [1], [0, 0, 1, 1], [], []>} : vector<8x32xbf16>, vector<32x96xbf16>, vector<8x96xf32> -> vector<8x96xf32>
    %cst_4 = arith.constant -8.000000e+00 : f32
    %cst_5 = arith.constant 8.000000e+00 : f32
    %5 = vector.broadcast %cst_4 : f32 to vector<8x96xf32>
    %6 = arith.maximumf %5, %4 : vector<8x96xf32>
    %7 = vector.broadcast %cst_5 : f32 to vector<8x96xf32>
    %8 = arith.minimumf %7, %6 : vector<8x96xf32>
    %9 = vector.extract_strided_slice %8 {offsets = [0, 0], sizes = [8, 32], strides = [1, 1]} : vector<8x96xf32> to vector<8x32xf32>
    %10 = vector.extract_strided_slice %8 {offsets = [0, 32], sizes = [8, 32], strides = [1, 1]} : vector<8x96xf32> to vector<8x32xf32>
    %11 = vector.extract_strided_slice %8 {offsets = [0, 64], sizes = [8, 32], strides = [1, 1]} : vector<8x96xf32> to vector<8x32xf32>
    %c0_6 = arith.constant 0 : index
    %c0_7 = arith.constant 0 : index
    %12 = vector.load %arg3[%c0_6, %c0_7] : memref<1x32xf32, #tpu.memory_space<vmem>>, vector<1x32xf32>
    %c0_8 = arith.constant 0 : index
    %c0_9 = arith.constant 0 : index
    %13 = vector.load %arg4[%c0_8, %c0_9] : memref<1x32xf32, #tpu.memory_space<vmem>>, vector<1x32xf32>
    %cst_10 = arith.constant dense<0.000000e+00> : vector<8xf32>
    %14 = vector.multi_reduction <add>, %9, %cst_10 [1] : vector<8x32xf32> to vector<8xf32>
    %15 = vector.shape_cast %14 : vector<8xf32> to vector<8x1xf32>
    %cst_11 = arith.constant 3.200000e+01 : f32
    %16 = vector.broadcast %cst_11 : f32 to vector<8x1xf32>
    %17 = arith.divf %15, %16 : vector<8x1xf32>
    %18 = vector.broadcast %17 : vector<8x1xf32> to vector<8x32xf32>
    %19 = arith.subf %9, %18 : vector<8x32xf32>
    %20 = arith.mulf %19, %19 : vector<8x32xf32>
    %cst_12 = arith.constant dense<0.000000e+00> : vector<8xf32>
    %21 = vector.multi_reduction <add>, %20, %cst_12 [1] : vector<8x32xf32> to vector<8xf32>
    %22 = vector.shape_cast %21 : vector<8xf32> to vector<8x1xf32>
    %cst_13 = arith.constant 3.200000e+01 : f32
    %23 = vector.broadcast %cst_13 : f32 to vector<8x1xf32>
    %24 = arith.divf %22, %23 : vector<8x1xf32>
    %25 = vector.broadcast %17 : vector<8x1xf32> to vector<8x32xf32>
    %26 = arith.subf %9, %25 : vector<8x32xf32>
    %cst_14 = arith.constant 9.99999974E-6 : f32
    %27 = vector.broadcast %cst_14 : f32 to vector<8x1xf32>
    %28 = arith.addf %24, %27 : vector<8x1xf32>
    %29 = math.rsqrt %28 : vector<8x1xf32>
    %30 = vector.broadcast %29 : vector<8x1xf32> to vector<8x32xf32>
    %31 = arith.mulf %26, %30 : vector<8x32xf32>
    %32 = vector.broadcast %12 : vector<1x32xf32> to vector<8x32xf32>
    %33 = arith.mulf %31, %32 : vector<8x32xf32>
    %34 = vector.broadcast %13 : vector<1x32xf32> to vector<8x32xf32>
    %35 = arith.addf %33, %34 : vector<8x32xf32>
    %c0_15 = arith.constant 0 : index
    %c0_16 = arith.constant 0 : index
    %36 = vector.load %arg5[%c0_15, %c0_16] : memref<1x32xf32, #tpu.memory_space<vmem>>, vector<1x32xf32>
    %c0_17 = arith.constant 0 : index
    %c0_18 = arith.constant 0 : index
    %37 = vector.load %arg6[%c0_17, %c0_18] : memref<1x32xf32, #tpu.memory_space<vmem>>, vector<1x32xf32>
    %cst_19 = arith.constant dense<0.000000e+00> : vector<8xf32>
    %38 = vector.multi_reduction <add>, %10, %cst_19 [1] : vector<8x32xf32> to vector<8xf32>
    %39 = vector.shape_cast %38 : vector<8xf32> to vector<8x1xf32>
    %cst_20 = arith.constant 3.200000e+01 : f32
    %40 = vector.broadcast %cst_20 : f32 to vector<8x1xf32>
    %41 = arith.divf %39, %40 : vector<8x1xf32>
    %42 = vector.broadcast %41 : vector<8x1xf32> to vector<8x32xf32>
    %43 = arith.subf %10, %42 : vector<8x32xf32>
    %44 = arith.mulf %43, %43 : vector<8x32xf32>
    %cst_21 = arith.constant dense<0.000000e+00> : vector<8xf32>
    %45 = vector.multi_reduction <add>, %44, %cst_21 [1] : vector<8x32xf32> to vector<8xf32>
    %46 = vector.shape_cast %45 : vector<8xf32> to vector<8x1xf32>
    %cst_22 = arith.constant 3.200000e+01 : f32
    %47 = vector.broadcast %cst_22 : f32 to vector<8x1xf32>
    %48 = arith.divf %46, %47 : vector<8x1xf32>
    %49 = vector.broadcast %41 : vector<8x1xf32> to vector<8x32xf32>
    %50 = arith.subf %10, %49 : vector<8x32xf32>
    %cst_23 = arith.constant 9.99999974E-6 : f32
    %51 = vector.broadcast %cst_23 : f32 to vector<8x1xf32>
    %52 = arith.addf %48, %51 : vector<8x1xf32>
    %53 = math.rsqrt %52 : vector<8x1xf32>
    %54 = vector.broadcast %53 : vector<8x1xf32> to vector<8x32xf32>
    %55 = arith.mulf %50, %54 : vector<8x32xf32>
    %56 = vector.broadcast %36 : vector<1x32xf32> to vector<8x32xf32>
    %57 = arith.mulf %55, %56 : vector<8x32xf32>
    %58 = vector.broadcast %37 : vector<1x32xf32> to vector<8x32xf32>
    %59 = arith.addf %57, %58 : vector<8x32xf32>
    %60 = vector.extract_strided_slice %35 {offsets = [0, 0], sizes = [8, 8], strides = [1, 1]} : vector<8x32xf32> to vector<8x8xf32>
    %61 = vector.extract_strided_slice %35 {offsets = [0, 8], sizes = [8, 8], strides = [1, 1]} : vector<8x32xf32> to vector<8x8xf32>
    %62 = vector.extract_strided_slice %35 {offsets = [0, 16], sizes = [8, 8], strides = [1, 1]} : vector<8x32xf32> to vector<8x8xf32>
    %63 = vector.extract_strided_slice %35 {offsets = [0, 24], sizes = [8, 8], strides = [1, 1]} : vector<8x32xf32> to vector<8x8xf32>
    %64 = vector.shape_cast %60 : vector<8x8xf32> to vector<1x8x8xf32>
    %65 = vector.shape_cast %61 : vector<8x8xf32> to vector<1x8x8xf32>
    %66 = vector.shape_cast %62 : vector<8x8xf32> to vector<1x8x8xf32>
    %67 = vector.shape_cast %63 : vector<8x8xf32> to vector<1x8x8xf32>
    %68 = tpu.concatenate %64, %65, %66, %67 in 0 : vector<1x8x8xf32>, vector<1x8x8xf32>, vector<1x8x8xf32>, vector<1x8x8xf32> -> vector<4x8x8xf32>
    %69 = arith.truncf %68 : vector<4x8x8xf32> to vector<4x8x8xbf16>
    %70 = vector.extract_strided_slice %59 {offsets = [0, 0], sizes = [8, 8], strides = [1, 1]} : vector<8x32xf32> to vector<8x8xf32>
    %71 = vector.extract_strided_slice %59 {offsets = [0, 8], sizes = [8, 8], strides = [1, 1]} : vector<8x32xf32> to vector<8x8xf32>
    %72 = vector.extract_strided_slice %59 {offsets = [0, 16], sizes = [8, 8], strides = [1, 1]} : vector<8x32xf32> to vector<8x8xf32>
    %73 = vector.extract_strided_slice %59 {offsets = [0, 24], sizes = [8, 8], strides = [1, 1]} : vector<8x32xf32> to vector<8x8xf32>
    %74 = vector.shape_cast %70 : vector<8x8xf32> to vector<1x8x8xf32>
    %75 = vector.shape_cast %71 : vector<8x8xf32> to vector<1x8x8xf32>
    %76 = vector.shape_cast %72 : vector<8x8xf32> to vector<1x8x8xf32>
    %77 = vector.shape_cast %73 : vector<8x8xf32> to vector<1x8x8xf32>
    %78 = tpu.concatenate %74, %75, %76, %77 in 0 : vector<1x8x8xf32>, vector<1x8x8xf32>, vector<1x8x8xf32>, vector<1x8x8xf32> -> vector<4x8x8xf32>
    %79 = arith.truncf %78 : vector<4x8x8xf32> to vector<4x8x8xbf16>
    %80 = vector.extract_strided_slice %11 {offsets = [0, 0], sizes = [8, 8], strides = [1, 1]} : vector<8x32xf32> to vector<8x8xf32>
    %81 = vector.extract_strided_slice %11 {offsets = [0, 8], sizes = [8, 8], strides = [1, 1]} : vector<8x32xf32> to vector<8x8xf32>
    %82 = vector.extract_strided_slice %11 {offsets = [0, 16], sizes = [8, 8], strides = [1, 1]} : vector<8x32xf32> to vector<8x8xf32>
    %83 = vector.extract_strided_slice %11 {offsets = [0, 24], sizes = [8, 8], strides = [1, 1]} : vector<8x32xf32> to vector<8x8xf32>
    %84 = vector.shape_cast %80 : vector<8x8xf32> to vector<1x8x8xf32>
    %85 = vector.shape_cast %81 : vector<8x8xf32> to vector<1x8x8xf32>
    %86 = vector.shape_cast %82 : vector<8x8xf32> to vector<1x8x8xf32>
    %87 = vector.shape_cast %83 : vector<8x8xf32> to vector<1x8x8xf32>
    %88 = tpu.concatenate %84, %85, %86, %87 in 0 : vector<1x8x8xf32>, vector<1x8x8xf32>, vector<1x8x8xf32>, vector<1x8x8xf32> -> vector<4x8x8xf32>
    %89 = arith.truncf %88 : vector<4x8x8xf32> to vector<4x8x8xbf16>
    "tpu.trace_start"() <{level = 10 : i32, message = "hqd,hkd->hqk"}> : () -> ()
    %cst_24 = arith.constant dense<0.000000e+00> : vector<4x8x8xf32>
    %90 = tpu.matmul %69, %79, %cst_24 {dimension_numbers = #tpu.dot_dimension_numbers<[2], [2], [1], [1], [0, 0, 0, 1, 1, 1], [0], [0]>} : vector<4x8x8xbf16>, vector<4x8x8xbf16>, vector<4x8x8xf32> -> vector<4x8x8xf32>
    "tpu.trace_stop"() : () -> ()
    %cst_25 = arith.constant 0.353553385 : f32
    %91 = vector.broadcast %cst_25 : f32 to vector<4x8x8xf32>
    %92 = arith.mulf %90, %91 : vector<4x8x8xf32>
    %93 = tpu.iota {dimensions = array<i32: 0>} : vector<8x8xi32>
    %94 = tpu.iota {dimensions = array<i32: 1>} : vector<8x8xi32>
    %95 = arith.subi %94, %93 : vector<8x8xi32>
    %96 = arith.sitofp %95 : vector<8x8xi32> to vector<8x8xf32>
    %97 = arith.cmpi sle, %94, %93 : vector<8x8xi32>
    %cst_26 = arith.constant 0.000000e+00 : f32
    %cst_27 = arith.constant -1.000000e+30 : f32
    %98 = vector.broadcast %cst_26 : f32 to vector<8x8xf32>
    %99 = vector.broadcast %cst_27 : f32 to vector<8x8xf32>
    %100 = arith.select %97, %98, %99 : vector<8x8xi1>, vector<8x8xf32>
    %c0_28 = arith.constant 0 : index
    %101 = memref.load %arg8[%c0_28] : memref<4xf32, #tpu.memory_space<smem>>
    %102 = vector.broadcast %101 : f32 to vector<8x8xf32>
    %103 = arith.mulf %102, %96 : vector<8x8xf32>
    %c1 = arith.constant 1 : index
    %104 = memref.load %arg8[%c1] : memref<4xf32, #tpu.memory_space<smem>>
    %105 = vector.broadcast %104 : f32 to vector<8x8xf32>
    %106 = arith.mulf %105, %96 : vector<8x8xf32>
    %c2 = arith.constant 2 : index
    %107 = memref.load %arg8[%c2] : memref<4xf32, #tpu.memory_space<smem>>
    %108 = vector.broadcast %107 : f32 to vector<8x8xf32>
    %109 = arith.mulf %108, %96 : vector<8x8xf32>
    %c3 = arith.constant 3 : index
    %110 = memref.load %arg8[%c3] : memref<4xf32, #tpu.memory_space<smem>>
    %111 = vector.broadcast %110 : f32 to vector<8x8xf32>
    %112 = arith.mulf %111, %96 : vector<8x8xf32>
    %113 = vector.shape_cast %103 : vector<8x8xf32> to vector<1x8x8xf32>
    %114 = vector.shape_cast %106 : vector<8x8xf32> to vector<1x8x8xf32>
    %115 = vector.shape_cast %109 : vector<8x8xf32> to vector<1x8x8xf32>
    %116 = vector.shape_cast %112 : vector<8x8xf32> to vector<1x8x8xf32>
    %117 = tpu.concatenate %113, %114, %115, %116 in 0 : vector<1x8x8xf32>, vector<1x8x8xf32>, vector<1x8x8xf32>, vector<1x8x8xf32> -> vector<4x8x8xf32>
    %118 = vector.shape_cast %100 : vector<8x8xf32> to vector<1x8x8xf32>
    %119 = vector.broadcast %118 : vector<1x8x8xf32> to vector<4x8x8xf32>
    %120 = arith.addf %117, %119 : vector<4x8x8xf32>
    %121 = arith.addf %92, %120 : vector<4x8x8xf32>
    %cst_29 = arith.constant dense<0xFF800000> : vector<4x8xf32>
    %122 = vector.multi_reduction <maximumf>, %121, %cst_29 [2] : vector<4x8x8xf32> to vector<4x8xf32>
    %123 = vector.shape_cast %122 : vector<4x8xf32> to vector<4x8x1xf32>
    %124 = vector.broadcast %123 : vector<4x8x1xf32> to vector<4x8x8xf32>
    %125 = arith.subf %121, %124 : vector<4x8x8xf32>
    %126 = math.exp %125 : vector<4x8x8xf32>
    %cst_30 = arith.constant dense<0.000000e+00> : vector<4x8xf32>
    %127 = vector.multi_reduction <add>, %126, %cst_30 [2] : vector<4x8x8xf32> to vector<4x8xf32>
    %128 = vector.shape_cast %127 : vector<4x8xf32> to vector<4x8x1xf32>
    %129 = tpu.reciprocal %128 {approx = true} : vector<4x8x1xf32> -> vector<4x8x1xf32>
    %130 = vector.broadcast %129 : vector<4x8x1xf32> to vector<4x8x8xf32>
    %131 = arith.mulf %126, %130 : vector<4x8x8xf32>
    %132 = arith.truncf %131 : vector<4x8x8xf32> to vector<4x8x8xbf16>
    "tpu.trace_start"() <{level = 10 : i32, message = "hqk,hkd->hqd"}> : () -> ()
    %cst_31 = arith.constant dense<0.000000e+00> : vector<4x8x8xf32>
    %133 = tpu.matmul %132, %89, %cst_31 {dimension_numbers = #tpu.dot_dimension_numbers<[2], [1], [1], [2], [0, 0, 0, 1, 1, 2], [0], [0]>} : vector<4x8x8xbf16>, vector<4x8x8xbf16>, vector<4x8x8xf32> -> vector<4x8x8xf32>
    "tpu.trace_stop"() : () -> ()
    %134 = vector.extract_strided_slice %133 {offsets = [0, 0, 0], sizes = [1, 8, 8], strides = [1, 1, 1]} : vector<4x8x8xf32> to vector<1x8x8xf32>
    %135 = vector.shape_cast %134 : vector<1x8x8xf32> to vector<8x8xf32>
    %c0_32 = arith.constant 0 : index
    %c0_33 = arith.constant 0 : index
    %136 = vector.load %arg10[%c0_32, %c0_33] : memref<8x32xf32, #tpu.memory_space<vmem>>, vector<8x8xf32>
    tpu.vector_store %arg10[%c0_32, %c0_33], %135 {strides = array<i32>} : memref<8x32xf32, #tpu.memory_space<vmem>>, vector<8x8xf32>,
    %137 = vector.extract_strided_slice %133 {offsets = [1, 0, 0], sizes = [1, 8, 8], strides = [1, 1, 1]} : vector<4x8x8xf32> to vector<1x8x8xf32>
    %138 = vector.shape_cast %137 : vector<1x8x8xf32> to vector<8x8xf32>
    %c0_34 = arith.constant 0 : index
    %c8 = arith.constant 8 : index
    %139 = vector.load %arg10[%c0_34, %c8] : memref<8x32xf32, #tpu.memory_space<vmem>>, vector<8x8xf32>
    tpu.vector_store %arg10[%c0_34, %c8], %138 {strides = array<i32>} : memref<8x32xf32, #tpu.memory_space<vmem>>, vector<8x8xf32>,
    %140 = vector.extract_strided_slice %133 {offsets = [2, 0, 0], sizes = [1, 8, 8], strides = [1, 1, 1]} : vector<4x8x8xf32> to vector<1x8x8xf32>
    %141 = vector.shape_cast %140 : vector<1x8x8xf32> to vector<8x8xf32>
    %c0_35 = arith.constant 0 : index
    %c16 = arith.constant 16 : index
    %142 = vector.load %arg10[%c0_35, %c16] : memref<8x32xf32, #tpu.memory_space<vmem>>, vector<8x8xf32>
    tpu.vector_store %arg10[%c0_35, %c16], %141 {strides = array<i32>} : memref<8x32xf32, #tpu.memory_space<vmem>>, vector<8x8xf32>,
    %143 = vector.extract_strided_slice %133 {offsets = [3, 0, 0], sizes = [1, 8, 8], strides = [1, 1, 1]} : vector<4x8x8xf32> to vector<1x8x8xf32>
    %144 = vector.shape_cast %143 : vector<1x8x8xf32> to vector<8x8xf32>
    %c0_36 = arith.constant 0 : index
    %c24 = arith.constant 24 : index
    %145 = vector.load %arg10[%c0_36, %c24] : memref<8x32xf32, #tpu.memory_space<vmem>>, vector<8x8xf32>
    tpu.vector_store %arg10[%c0_36, %c24], %144 {strides = array<i32>} : memref<8x32xf32, #tpu.memory_space<vmem>>, vector<8x8xf32>,
    %c0_37 = arith.constant 0 : index
    %c0_38 = arith.constant 0 : index
    %146 = vector.load %arg10[%c0_37, %c0_38] : memref<8x32xf32, #tpu.memory_space<vmem>>, vector<8x32xf32>
    %147 = arith.truncf %146 : vector<8x32xf32> to vector<8x32xbf16>
    %c0_39 = arith.constant 0 : index
    %c0_40 = arith.constant 0 : index
    %148 = vector.load %arg7[%c0_39, %c0_40] : memref<32x32xbf16, #tpu.memory_space<vmem>>, vector<32x32xbf16>
    %cst_41 = arith.constant dense<0.000000e+00> : vector<8x32xf32>
    %149 = tpu.matmul %147, %148, %cst_41 {dimension_numbers = #tpu.dot_dimension_numbers<[1], [0], [0], [1], [0, 0, 1, 1], [], []>} : vector<8x32xbf16>, vector<32x32xbf16>, vector<8x32xf32> -> vector<8x32xf32>
    %c0_42 = arith.constant 0 : index
    %c0_43 = arith.constant 0 : index
    %c0_44 = arith.constant 0 : index
    %150 = vector.load %arg9[%c0_42, %c0_43, %c0_44] : memref<1x8x32xf32, #tpu.memory_space<vmem>>, vector<1x8x32xf32>
    %151 = vector.shape_cast %150 : vector<1x8x32xf32> to vector<8x32xf32>
    %152 = vector.shape_cast %149 : vector<8x32xf32> to vector<1x8x32xf32>
    tpu.vector_store %arg9[%c0_42, %c0_43, %c0_44], %152 {strides = array<i32>} : memref<1x8x32xf32, #tpu.memory_space<vmem>>, vector<1x8x32xf32>,
    return
  }
  func.func @transform_0(%arg0: i32) -> (i32, i32, i32) {
    %c0_i32 = arith.constant 0 : i32
    %c0_i32_0 = arith.constant 0 : i32
    %c0_i32_1 = arith.constant 0 : i32
    return %arg0, %c0_i32, %c0_i32_0 : i32, i32, i32
  }
  func.func @transform_1(%arg0: i32) -> (i32, i32) {
    %c0_i32 = arith.constant 0 : i32
    %c0_i32_0 = arith.constant 0 : i32
    %c0_i32_1 = arith.constant 0 : i32
    return %c0_i32, %c0_i32_0 : i32, i32
  }
  func.func @transform_2(%arg0: i32) -> (i32, i32) {
    %c0_i32 = arith.constant 0 : i32
    %c0_i32_0 = arith.constant 0 : i32
    %c0_i32_1 = arith.constant 0 : i32
    return %c0_i32, %c0_i32_0 : i32, i32
  }
  func.func @transform_3(%arg0: i32) -> (i32, i32) {
    %c0_i32 = arith.constant 0 : i32
    %c0_i32_0 = arith.constant 0 : i32
    %c0_i32_1 = arith.constant 0 : i32
    return %c0_i32, %c0_i32_0 : i32, i32
  }
  func.func @transform_4(%arg0: i32) -> (i32, i32) {
    %c0_i32 = arith.constant 0 : i32
    %c0_i32_0 = arith.constant 0 : i32
    %c0_i32_1 = arith.constant 0 : i32
    return %c0_i32, %c0_i32_0 : i32, i32
  }
  func.func @transform_5(%arg0: i32) -> (i32, i32) {
    %c0_i32 = arith.constant 0 : i32
    %c0_i32_0 = arith.constant 0 : i32
    %c0_i32_1 = arith.constant 0 : i32
    return %c0_i32, %c0_i32_0 : i32, i32
  }
  func.func @transform_6(%arg0: i32) -> (i32, i32) {
    %c0_i32 = arith.constant 0 : i32
    %c0_i32_0 = arith.constant 0 : i32
    %c0_i32_1 = arith.constant 0 : i32
    return %c0_i32, %c0_i32_0 : i32, i32
  }
  func.func @transform_7(%arg0: i32) -> i32 {
    %c0_i32 = arith.constant 0 : i32
    %c0_i32_0 = arith.constant 0 : i32
    return %c0_i32 : i32
  }
  func.func @transform_8(%arg0: i32) -> (i32, i32, i32) {
    %c0_i32 = arith.constant 0 : i32
    %c0_i32_0 = arith.constant 0 : i32
    %c0_i32_1 = arith.constant 0 : i32
    return %arg0, %c0_i32, %c0_i32_0 : i32, i32, i32
  }
}

</mosaic_0001>

<llo_original>
// kernel: tpu_custom_call.1
$region0: #{tpu_custom_call.1}
  #allocation0 [shape = 'u32[]', space=smem, size = 0x4, offset = 0x4, fixed_abs, tag = 'smem constant byte address 0x4 - core index']
  #allocation1 [shape = 'u32[144,128]{1,0:T(1,128)}', space=vmem, size = 0x12000, scoped, tag = 'internal scratch']
  #allocation2 [shape = 'f32[8,32]{1,0:T(8,128)}', space=vmem, size = 0x1000, scoped, tag = 'scratch operand']
  %s0 = inlined_call_operand.hbm [shape: f32[4,8,32], index: 0, kind: input, shape index: {}]
  %s1 = inlined_call_operand.hbm [shape: bf16[32,96], index: 1, kind: input, shape index: {}]
  %s2 = inlined_call_operand.vmem [shape: f32[1,32], index: 2, kind: input, shape index: {}]
  %s3 = inlined_call_operand.vmem [shape: f32[1,32], index: 3, kind: input, shape index: {}]
  %s4 = inlined_call_operand.vmem [shape: f32[1,32], index: 4, kind: input, shape index: {}]
  %s5 = inlined_call_operand.vmem [shape: f32[1,32], index: 5, kind: input, shape index: {}]
  %s6 = inlined_call_operand.hbm [shape: bf16[32,32], index: 6, kind: input, shape index: {}]
  %s7 = inlined_call_operand.vmem [shape: f32[4], index: 7, kind: input, shape index: {}]
  %s8 = inlined_call_operand.hbm [shape: f32[4,8,32], index: 8, kind: output, shape index: {}]
  %s9 = sld [smem:[#allocation0]]
  $region81: #{tpu_custom_call.1} parent=0
    _
  %s11 = ssub.s32 1, %s9
  %s12 = scalar_select 0, %s11, %s9
  $region1: #{tpu_custom_call.1} parent=0
    #allocation3 [shape = 'u8[8192]{0}', space=vmem, size = 0x2000, scoped, tag = 'input window, operand 0']
    #allocation4 [shape = 's32[2]{0}', space=sflag, size = 0x8, scoped, tag = 'scoped memory for tpu_custom_call.1']
    #allocation5 [shape = 's32[2]{0}', space=sflag, size = 0x8, scoped, tag = 'scoped memory for tpu_custom_call.1']
    #allocation6 [shape = 's32[2]{0}', space=sflag, size = 0x8, scoped, tag = 'scoped memory for tpu_custom_call.1']
    #allocation7 [shape = 'u8[8192]{0}', space=vmem, size = 0x2000, scoped, tag = 'input window, operand 1, single buffered']
    #allocation8 [shape = 's32[1]{0}', space=sflag, size = 0x4, scoped, tag = 'scoped memory for tpu_custom_call.1']
    #allocation9 [shape = 'u8[8192]{0}', space=vmem, size = 0x2000, scoped, tag = 'input window, operand 6, single buffered']
    #allocation10 [shape = 'u8[512]{0}', space=smem, size = 0x200, scoped, tag = 'input window, operand 7, single buffered']
    #allocation11 [shape = 'u8[8192]{0}', space=vmem, size = 0x2000, scoped, tag = 'output window, operand 0']
    %13 = vsyncpa [#allocation4], 0
    %s14 = scalar_lea.sflag [#allocation4], 1
    %15 = vsyncpa %s14, 0
    %16 = vsyncpa [#allocation8], 0
    %17 = vsyncpa [#allocation6], 0
    %18 = vsyncpa [#allocation5], 0
    %s19 = scalar_lea.sflag [#allocation5], 1
    %20 = vsyncpa %s19, 0
    loop: start=0, step=1, limit=6
    $region2: #{tpu_custom_call.1} parent=1 // loop_pre_header
      _
    $region3: #{tpu_custom_call.1} parent=1 // loop_header
      %s22 = sphi 0, %s26
      %p23 = scmp.ge.s32.totalorder %s22, 6
      %s32 = sphi 0, %s34
      %s35 = sphi 0, %s32
      %s36 = sphi 0, %s35
      %s52 = sphi 0, %s36
      %s56 = sphi 0, %s56
      %s58 = sphi 0, %s56
      %s59 = sphi 0, %s58
      %s73 = sphi 0, %s59
      %s77 = sphi 0, %s77
      %s79 = sphi 0, %s77
      %s80 = sphi 0, %s79
      %s94 = sphi 0, %s80
      %s98 = sphi 0, %s98
      %s100 = sphi 0, %s98
      %s101 = sphi 0, %s100
      %s115 = sphi 0, %s101
      %s119 = sphi 0, %s119
      %s121 = sphi 0, %s119
      %s122 = sphi 0, %s121
      %s136 = sphi 0, %s122
      %s140 = sphi 0, %s140
      %s142 = sphi 0, %s140
      %s143 = sphi 0, %s142
      %s157 = sphi 0, %s143
      %s161 = sphi 0, %s161
      %s163 = sphi 0, %s161
      %s164 = sphi 0, %s163
      %s178 = sphi 0, %s164
      %s182 = sphi 0, %s182
      %s184 = sphi 0, %s182
      %s185 = sphi 0, %s184
      %s199 = sphi 0, %s185
      %s205 = sphi 0, %s207
      %s208 = sphi 0, %s205
      %s209 = sphi 0, %s208
      %s225 = sphi 0, %s209
    $region4: #{tpu_custom_call.1} parent=1 // loop_header_branch
      %25 = sbr.rel (%p23) target = $region8
    $region5: #{tpu_custom_call.1} parent=1 // loop_body
      %s27 = ssub.s32 %s22, 1
      %s28 = ssub.s32 %s22, 2
      %s29 = sadd.s32 %s22, 1
      %s30 = ssub.s32 %s22, %s29
      %p31 = scmp.eq.s32.totalorder %s30, 0
      %s33 = sadd.s32 %s32, 1
      %s34 = scalar_select %p31, %s32, %s33
      %p37 = pneg %p31
      %p38 = scmp.eq.s32.totalorder %s22, 3
      %p39 = por %p37, %p38
      %p40 = scmp.ne.s32.totalorder %s32, %s35
      %p41 = scmp.eq.s32.totalorder %s22, 0
      %p42 = por %p40, %p41
      %p43 = scmp.ne.s32.totalorder %s32, %s35
      %p44 = scmp.eq.s32.totalorder %s27, 3
      %p45 = por %p43, %p44
      %p46 = scmp.ne.s32.totalorder %s35, %s36
      %p47 = scmp.eq.s32.totalorder %s27, 0
      %p48 = por %p46, %p47
      %p49 = scmp.ne.s32.totalorder %s35, %s36
      %p50 = scmp.eq.s32.totalorder %s28, 3
      %p51 = por %p49, %p50
      %p53 = scmp.ne.s32.totalorder %s36, %s52
      %p54 = scmp.eq.s32.totalorder %s28, 0
      %p55 = por %p53, %p54
      %s57 = sadd.s32 %s56, 1
      %p60 = scmp.eq.s32.totalorder %s22, 3
      %p61 = scmp.ne.s32.totalorder %s56, %s58
      %p62 = scmp.eq.s32.totalorder %s22, 0
      %p63 = por %p61, %p62
      %p64 = scmp.ne.s32.totalorder %s56, %s58
      %p65 = scmp.eq.s32.totalorder %s27, 3
      %p66 = por %p64, %p65
      %p67 = scmp.ne.s32.totalorder %s58, %s59
      %p68 = scmp.eq.s32.totalorder %s27, 0
      %p69 = por %p67, %p68
      %p70 = scmp.ne.s32.totalorder %s58, %s59
      %p71 = scmp.eq.s32.totalorder %s28, 3
      %p72 = por %p70, %p71
      %p74 = scmp.ne.s32.totalorder %s59, %s73
      %p75 = scmp.eq.s32.totalorder %s28, 0
      %p76 = por %p74, %p75
      %s78 = sadd.s32 %s77, 1
      %p81 = scmp.eq.s32.totalorder %s22, 3
      %p82 = scmp.ne.s32.totalorder %s77, %s79
      %p83 = scmp.eq.s32.totalorder %s22, 0
      %p84 = por %p82, %p83
      %p85 = scmp.ne.s32.totalorder %s77, %s79
      %p86 = scmp.eq.s32.totalorder %s27, 3
      %p87 = por %p85, %p86
      %p88 = scmp.ne.s32.totalorder %s79, %s80
      %p89 = scmp.eq.s32.totalorder %s27, 0
      %p90 = por %p88, %p89
      %p91 = scmp.ne.s32.totalorder %s79, %s80
      %p92 = scmp.eq.s32.totalorder %s28, 3
      %p93 = por %p91, %p92
      %p95 = scmp.ne.s32.totalorder %s80, %s94
      %p96 = scmp.eq.s32.totalorder %s28, 0
      %p97 = por %p95, %p96
      %s99 = sadd.s32 %s98, 1
      %p102 = scmp.eq.s32.totalorder %s22, 3
      %p103 = scmp.ne.s32.totalorder %s98, %s100
      %p104 = scmp.eq.s32.totalorder %s22, 0
      %p105 = por %p103, %p104
      %p106 = scmp.ne.s32.totalorder %s98, %s100
      %p107 = scmp.eq.s32.totalorder %s27, 3
      %p108 = por %p106, %p107
      %p109 = scmp.ne.s32.totalorder %s100, %s101
      %p110 = scmp.eq.s32.totalorder %s27, 0
      %p111 = por %p109, %p110
      %p112 = scmp.ne.s32.totalorder %s100, %s101
      %p113 = scmp.eq.s32.totalorder %s28, 3
      %p114 = por %p112, %p113
      %p116 = scmp.ne.s32.totalorder %s101, %s115
      %p117 = scmp.eq.s32.totalorder %s28, 0
      %p118 = por %p116, %p117
      %s120 = sadd.s32 %s119, 1
      %p123 = scmp.eq.s32.totalorder %s22, 3
      %p124 = scmp.ne.s32.totalorder %s119, %s121
      %p125 = scmp.eq.s32.totalorder %s22, 0
      %p126 = por %p124, %p125
      %p127 = scmp.ne.s32.totalorder %s119, %s121
      %p128 = scmp.eq.s32.totalorder %s27, 3
      %p129 = por %p127, %p128
      %p130 = scmp.ne.s32.totalorder %s121, %s122
      %p131 = scmp.eq.s32.totalorder %s27, 0
      %p132 = por %p130, %p131
      %p133 = scmp.ne.s32.totalorder %s121, %s122
      %p134 = scmp.eq.s32.totalorder %s28, 3
      %p135 = por %p133, %p134
      %p137 = scmp.ne.s32.totalorder %s122, %s136
      %p138 = scmp.eq.s32.totalorder %s28, 0
      %p139 = por %p137, %p138
      %s141 = sadd.s32 %s140, 1
      %p144 = scmp.eq.s32.totalorder %s22, 3
      %p145 = scmp.ne.s32.totalorder %s140, %s142
      %p146 = scmp.eq.s32.totalorder %s22, 0
      %p147 = por %p145, %p146
      %p148 = scmp.ne.s32.totalorder %s140, %s142
      %p149 = scmp.eq.s32.totalorder %s27, 3
      %p150 = por %p148, %p149
      %p151 = scmp.ne.s32.totalorder %s142, %s143
      %p152 = scmp.eq.s32.totalorder %s27, 0
      %p153 = por %p151, %p152
      %p154 = scmp.ne.s32.totalorder %s142, %s143
      %p155 = scmp.eq.s32.totalorder %s28, 3
      %p156 = por %p154, %p155
      %p158 = scmp.ne.s32.totalorder %s143, %s157
      %p159 = scmp.eq.s32.totalorder %s28, 0
      %p160 = por %p158, %p159
      %s162 = sadd.s32 %s161, 1
      %p165 = scmp.eq.s32.totalorder %s22, 3
      %p166 = scmp.ne.s32.totalorder %s161, %s163
      %p167 = scmp.eq.s32.totalorder %s22, 0
      %p168 = por %p166, %p167
      %p169 = scmp.ne.s32.totalorder %s161, %s163
      %p170 = scmp.eq.s32.totalorder %s27, 3
      %p171 = por %p169, %p170
      %p172 = scmp.ne.s32.totalorder %s163, %s164
      %p173 = scmp.eq.s32.totalorder %s27, 0
      %p174 = por %p172, %p173
      %p175 = scmp.ne.s32.totalorder %s163, %s164
      %p176 = scmp.eq.s32.totalorder %s28, 3
      %p177 = por %p175, %p176
      %p179 = scmp.ne.s32.totalorder %s164, %s178
      %p180 = scmp.eq.s32.totalorder %s28, 0
      %p181 = por %p179, %p180
      %s183 = sadd.s32 %s182, 1
      %p186 = scmp.eq.s32.totalorder %s22, 3
      %p187 = scmp.ne.s32.totalorder %s182, %s184
      %p188 = scmp.eq.s32.totalorder %s22, 0
      %p189 = por %p187, %p188
      %p190 = scmp.ne.s32.totalorder %s182, %s184
      %p191 = scmp.eq.s32.totalorder %s27, 3
      %p192 = por %p190, %p191
      %p193 = scmp.ne.s32.totalorder %s184, %s185
      %p194 = scmp.eq.s32.totalorder %s27, 0
      %p195 = por %p193, %p194
      %p196 = scmp.ne.s32.totalorder %s184, %s185
      %p197 = scmp.eq.s32.totalorder %s28, 3
      %p198 = por %p196, %p197
      %p200 = scmp.ne.s32.totalorder %s185, %s199
      %p201 = scmp.eq.s32.totalorder %s28, 0
      %p202 = por %p200, %p201
      %s203 = ssub.s32 %s22, %s29
      %p204 = scmp.eq.s32.totalorder %s203, 0
      %s206 = sadd.s32 %s205, 1
      %s207 = scalar_select %p204, %s205, %s206
      %p210 = pneg %p204
      %p211 = scmp.eq.s32.totalorder %s22, 3
      %p212 = por %p210, %p211
      %p213 = scmp.ne.s32.totalorder %s205, %s208
      %p214 = scmp.eq.s32.totalorder %s22, 0
      %p215 = por %p213, %p214
      %p216 = scmp.ne.s32.totalorder %s205, %s208
      %p217 = scmp.eq.s32.totalorder %s27, 3
      %p218 = por %p216, %p217
      %p219 = scmp.ne.s32.totalorder %s208, %s209
      %p220 = scmp.eq.s32.totalorder %s27, 0
      %p221 = por %p219, %p220
      %p222 = scmp.ne.s32.totalorder %s208, %s209
      %p223 = scmp.eq.s32.totalorder %s28, 3
      %p224 = por %p222, %p223
      %p226 = scmp.ne.s32.totalorder %s209, %s225
      %p227 = scmp.eq.s32.totalorder %s28, 0
      %p228 = por %p226, %p227
      %p229 = scmp.le.s32.totalorder 1, %s22
      %p230 = scmp.lt.s32.totalorder %s22, 5
      %p231 = pnand %p229, %p230
      %p232 = pneg %p231
      // Predicated region
      $region9: #{tpu_custom_call.1} parent=5 // pred_check
        _
      $region10: #{tpu_custom_call.1} parent=5 // pred_check_branch
        %234 = sbr.rel (%p231) target = $region12
      $region11: #{tpu_custom_call.1} parent=5 // pred_region
        %s235 = ssub.s32 %s22, 1
        // Predicated region
        $region13: #{tpu_custom_call.1} parent=11 // pred_check
          %p236 = pneg %p69
        $region14: #{tpu_custom_call.1} parent=11 // pred_check_branch
          %238 = sbr.rel (%p236) target = $region16
        $region15: #{tpu_custom_call.1} parent=11 // pred_region
          %s240 = ssub.s32 256, 256
          %241 = vsyncadd [#allocation8], %s240
          %s242 = sshll.u32 [#allocation7], 4
          %s243 = int_to_ptr.vmem [resolvable:$true] %s242
          %248 = dma.hbm_to_vmem [thread:$0]  %s1, 256, %s243, [#allocation8], 64, 64, 4
        $region16: #{tpu_custom_call.1} parent=11 // pred_fallthru
          _
        // Predicated region
        $region17: #{tpu_custom_call.1} parent=11 // pred_check
          %p249 = pneg %p90
        $region18: #{tpu_custom_call.1} parent=11 // pred_check_branch
          %251 = sbr.rel (%p249) target = $region20
        $region19: #{tpu_custom_call.1} parent=11 // pred_region
          _
        $region20: #{tpu_custom_call.1} parent=11 // pred_fallthru
          _
        // Predicated region
        $region21: #{tpu_custom_call.1} parent=11 // pred_check
          %p252 = pneg %p111
        $region22: #{tpu_custom_call.1} parent=11 // pred_check_branch
          %254 = sbr.rel (%p252) target = $region24
        $region23: #{tpu_custom_call.1} parent=11 // pred_region
          _
        $region24: #{tpu_custom_call.1} parent=11 // pred_fallthru
          _
        // Predicated region
        $region25: #{tpu_custom_call.1} parent=11 // pred_check
          %p255 = pneg %p132
        $region26: #{tpu_custom_call.1} parent=11 // pred_check_branch
          %257 = sbr.rel (%p255) target = $region28
        $region27: #{tpu_custom_call.1} parent=11 // pred_region
          _
        $region28: #{tpu_custom_call.1} parent=11 // pred_fallthru
          _
        // Predicated region
        $region29: #{tpu_custom_call.1} parent=11 // pred_check
          %p258 = pneg %p153
        $region30: #{tpu_custom_call.1} parent=11 // pred_check_branch
          %260 = sbr.rel (%p258) target = $region32
        $region31: #{tpu_custom_call.1} parent=11 // pred_region
          _
        $region32: #{tpu_custom_call.1} parent=11 // pred_fallthru
          _
        // Predicated region
        $region33: #{tpu_custom_call.1} parent=11 // pred_check
          %p261 = pneg %p174
        $region34: #{tpu_custom_call.1} parent=11 // pred_check_branch
          %263 = sbr.rel (%p261) target = $region36
        $region35: #{tpu_custom_call.1} parent=11 // pred_region
          %s265 = ssub.s32 256, 256
          %266 = vsyncadd [#allocation8], %s265
          %s267 = sshll.u32 [#allocation9], 4
          %s268 = int_to_ptr.vmem [resolvable:$true] %s267
          %273 = dma.hbm_to_vmem [thread:$0]  %s6, 256, %s268, [#allocation8], 64, 64, 4
        $region36: #{tpu_custom_call.1} parent=11 // pred_fallthru
          _
        // Predicated region
        $region37: #{tpu_custom_call.1} parent=11 // pred_check
          %p274 = pneg %p195
        $region38: #{tpu_custom_call.1} parent=11 // pred_check_branch
          %276 = sbr.rel (%p274) target = $region40
        $region39: #{tpu_custom_call.1} parent=11 // pred_region
          %s278 = ssub.s32 16, 16
          %279 = vsyncadd [#allocation6], %s278
          %s281 = sshll.u32 %s7, 4
          %s282 = int_to_ptr.vmem [resolvable:$true] %s281
          %284 = dma.vmem_to_smem %s282, 16, [#allocation10], [#allocation6]
        $region40: #{tpu_custom_call.1} parent=11 // pred_fallthru
          _
      $region12: #{tpu_custom_call.1} parent=5 // pred_fallthru
        _
      %p285 = scmp.lt.s32.totalorder %s22, 4
      // Predicated region
      $region41: #{tpu_custom_call.1} parent=5 // pred_check
        %p286 = pneg %p285
      $region42: #{tpu_custom_call.1} parent=5 // pred_check_branch
        %288 = sbr.rel (%p286) target = $region44
      $region43: #{tpu_custom_call.1} parent=5 // pred_region
        // Predicated region
        $region45: #{tpu_custom_call.1} parent=43 // pred_check
          %p289 = pneg %p42
        $region46: #{tpu_custom_call.1} parent=43 // pred_check_branch
          %291 = sbr.rel (%p289) target = $region48
        $region47: #{tpu_custom_call.1} parent=43 // pred_region
          %s292 = sand.u32 %s32, 1
          %s293 = scalar_lea.sflag [#allocation4], %s292
          %s294 = sand.u32 %s32, 1
          %s295 = smul.addr %s294, 8
          %s296 = scalar_lea.vmem [#allocation3], %s295
          %s298 = ssub.s32 128, 128
          %299 = vsyncadd %s293, %s298
          %s300 = smul.addr %s22, 128
          %s301 = scalar_lea.hbm %s0, %s300
          %s303 = sshll.u32 %s296, 4
          %s304 = int_to_ptr.vmem [resolvable:$true] %s303
          %306 = dma.hbm_to_vmem [thread:$0]  %s301, 128, %s304, %s293
        $region48: #{tpu_custom_call.1} parent=43 // pred_fallthru
          _
      $region44: #{tpu_custom_call.1} parent=5 // pred_fallthru
        _
      %p307 = scmp.le.s32.totalorder 1, %s22
      %p308 = scmp.lt.s32.totalorder %s22, 5
      %p309 = pnand %p307, %p308
      %p310 = pneg %p309
      // Predicated region
      $region49: #{tpu_custom_call.1} parent=5 // pred_check
        _
      $region50: #{tpu_custom_call.1} parent=5 // pred_check_branch
        %312 = sbr.rel (%p309) target = $region52
      $region51: #{tpu_custom_call.1} parent=5 // pred_region
        %s313 = ssub.s32 %s22, 1
        %s314 = sand.u32 %s35, 1
        %s315 = scalar_lea.sflag [#allocation4], %s314
        %s316 = sand.u32 %s35, 1
        %s317 = smul.addr %s316, 8
        %s318 = scalar_lea.vmem [#allocation3], %s317
        // Predicated region
        $region53: #{tpu_custom_call.1} parent=51 // pred_check
          %p319 = pneg %p48
        $region54: #{tpu_custom_call.1} parent=51 // pred_check_branch
          %321 = sbr.rel (%p319) target = $region56
        $region55: #{tpu_custom_call.1} parent=51 // pred_region
          %322 = dma.done %s315, 128
        $region56: #{tpu_custom_call.1} parent=51 // pred_fallthru
          _
        // Predicated region
        $region57: #{tpu_custom_call.1} parent=51 // pred_check
          %p323 = pneg %p69
        $region58: #{tpu_custom_call.1} parent=51 // pred_check_branch
          %325 = sbr.rel (%p323) target = $region60
        $region59: #{tpu_custom_call.1} parent=51 // pred_region
          %326 = dma.done [#allocation8], 256
        $region60: #{tpu_custom_call.1} parent=51 // pred_fallthru
          _
        // Predicated region
        $region61: #{tpu_custom_call.1} parent=51 // pred_check
          %p327 = pneg %p174
        $region62: #{tpu_custom_call.1} parent=51 // pred_check_branch
          %329 = sbr.rel (%p327) target = $region64
        $region63: #{tpu_custom_call.1} parent=51 // pred_region
          %330 = dma.done [#allocation8], 256
        $region64: #{tpu_custom_call.1} parent=51 // pred_fallthru
          _
        // Predicated region
        $region65: #{tpu_custom_call.1} parent=51 // pred_check
          %p331 = pneg %p195
        $region66: #{tpu_custom_call.1} parent=51 // pred_check_branch
          %333 = sbr.rel (%p331) target = $region68
        $region67: #{tpu_custom_call.1} parent=51 // pred_region
          %334 = dma.done [#allocation6], 16
        $region68: #{tpu_custom_call.1} parent=51 // pred_fallthru
          _
        %335 = sfence
        %s336 = sand.u32 %s35, 1
        %s337 = scalar_lea.sflag [#allocation4], %s336
        %s338 = sand.u32 %s35, 1
        %s339 = smul.addr %s338, 8
        %s340 = scalar_lea.vmem [#allocation3], %s339
        %p341 = pneg %p48
        %p342 = pneg %p45
        %p343 = pneg %p69
        %p344 = pneg %p66
        %p345 = pneg %p90
        %p346 = pneg %p87
        %p347 = pneg %p111
        %p348 = pneg %p108
        %p349 = pneg %p132
        %p350 = pneg %p129
        %p351 = pneg %p153
        %p352 = pneg %p150
        %p353 = pneg %p174
        %p354 = pneg %p171
        %p355 = pneg %p195
        %p356 = pneg %p192
        %p357 = pneg %p221
        %p358 = pneg %p218
        %s359 = sand.u32 %s208, 1
        %s360 = scalar_lea.sflag [#allocation5], %s359
        %s361 = sand.u32 %s208, 1
        %s362 = smul.addr %s361, 8
        %s363 = scalar_lea.vmem [#allocation11], %s362
        %v365 = vld [vmem:[%s318] sm:$0xff]
        %v366 = vpack.c.bf16 %v365, %v365
        %v367 = vld [vmem:[#allocation7] sm:$0xf]
        %v368 = vld [vmem:[#allocation7 + $0x4] sm:$0xf]
        %v369 = vld [vmem:[#allocation7 + $0x8] sm:$0xf]
        %v370 = vld [vmem:[#allocation7 + $0xc] sm:$0xf]
        %v375 = vunpack.c.l.b16 %v367
        %v376 = vunpack.c.l.b16 %v368
        %v377 = vunpack.c.l.b16 %v369
        %v378 = vunpack.c.l.b16 %v370
        %v379 = vpack.c.b16 %v376, %v375
        %v380 = vpack.c.b16 %v378, %v377
        %vm383 = vcmask 261120
        %v385 = vsel %vm383, %v366, 0
        %387 = vmatprep.subr.bf16.mxu0 0
        %388 = vmatpush1.bf16.msra.mxu0 0
        %389 = vmatprep.subr.bf16.mxu0 0
        %390 = vmatpush1.bf16.msra.mxu0 0
        %391 = vmatprep.subr.bf16.mxu0 0
        %392 = vmatpush1.bf16.msra.mxu0 0
        %393 = vmatprep.subr.bf16.mxu0 0
        %394 = vmatpush1.bf16.msra.mxu0 0
        %395 = vmatprep.subr.bf16.mxu0 0
        %396 = vmatpush1.bf16.msra.mxu0 0
        %397 = vmatprep.subr.bf16.mxu0 0
        %398 = vmatpush1.bf16.msra.mxu0 0
        %399 = vmatprep.subr.bf16.mxu0 0
        %400 = vmatpush1.bf16.msra.mxu0 %v380
        %401 = vmatprep.subr.bf16.mxu0 0
        %402 = vmatpush1.bf16.msra.mxu0 %v379
        %403 = vmatprep.subr.bf16.mxu0 0
        %404 = vmatpush2.bf16.msra.mxu0 0
        %405 = vmatprep.subr.bf16.mxu0 0
        %406 = vmatpush2.bf16.msra.mxu0 0
        %407 = vmatprep.subr.bf16.mxu0 0
        %408 = vmatpush2.bf16.msra.mxu0 0
        %409 = vmatprep.subr.bf16.mxu0 0
        %410 = vmatpush2.bf16.msra.mxu0 0
        %411 = vmatprep.subr.bf16.mxu0 0
        %412 = vmatpush2.bf16.msra.mxu0 0
        %413 = vmatprep.subr.bf16.mxu0 0
        %414 = vmatpush2.bf16.msra.mxu0 0
        %415 = vmatprep.subr.bf16.mxu0 0
        %416 = vmatpush2.bf16.msra.mxu0 0
        %417 = vmatprep.subr.bf16.mxu0 0
        %418 = vmatpush2.bf16.msra.mxu0 0
        %419 = vmatprep.mubr.bf16.mxu0 0
        %420 = vmatmul.mubr.bf16.gmra.mxu0 %v385
        %v421 = vpop.f32.mrf.mxu0
        %v422 = vadd.f32 0.0, %v421
        %v423 = vpop.f32.mrf.mxu0
        %v424 = vpop.f32.mrf.mxu0
        %v425 = vpop.f32.mrf.mxu0
        %426 = vdwg.mxu0
        %v427 = vmax.f32 %v422, -8.0
        %v428 = vmin.f32 %v427, 8.0
        %v429 = vld [vmem:[%s2] sm:$0x1]
        %v430 = vld [vmem:[%s3] sm:$0x1]
        %v431 = vsel %vm383, %v428, 0.0
        %432 = vadd.xlane.f32.xlu0 %v431
        %v433 = vpop.xlane.xlu0 %432
        %v434 = vrcp.pop 32.0
        %v435 = vmul.f32 %v433, %v434
        %v436 = vsub.f32 %v428, %v435
        %v437 = vmul.f32 %v436, %v436
        %v438 = vsel %vm383, %v437, 0.0
        %439 = vadd.xlane.f32.xlu0 %v438
        %v440 = vpop.xlane.xlu0 %439
        %v441 = vmul.f32 %v440, %v434
        %v442 = vadd.f32 %v441, 1e-05
        %v443 = vrsqrt.pop %v442
        %v444 = vmul.f32 %v436, %v443
        %v446 = vlaneseq
        %v447 = vshrl.u32 %v446, 7
        %v448 = vsub.s32 0, %v447
        %v449 = vrot.slane %v429, %v448
        %v451 = vmul.f32 %v444, %v449
        %v453 = vlaneseq
        %v454 = vshrl.u32 %v453, 7
        %v455 = vsub.s32 0, %v454
        %v456 = vrot.slane %v430, %v455
        %v458 = vadd.f32 %v451, %v456
        %v459 = vld [vmem:[%s4] sm:$0x1]
        %v460 = vld [vmem:[%s5] sm:$0x1]
        %462 = vrot.lane.b32.xlu0 %v428, 96
        %v463 = vpop.permute.xlu0 %462
        %v465 = vsel %vm383, %v463, 0.0
        %466 = vadd.xlane.f32.xlu0 %v465
        %v467 = vpop.xlane.xlu0 %466
        %v468 = vmul.f32 %v467, %v434
        %v469 = vsub.f32 %v428, %v468
        %v470 = vmul.f32 %v469, %v469
        %472 = vrot.lane.b32.xlu0 %v470, 96
        %v473 = vpop.permute.xlu0 %472
        %v475 = vsel %vm383, %v473, 0.0
        %476 = vadd.xlane.f32.xlu0 %v475
        %v477 = vpop.xlane.xlu0 %476
        %v478 = vmul.f32 %v477, %v434
        %v479 = vadd.f32 %v478, 1e-05
        %v480 = vrsqrt.pop %v479
        %v481 = vmul.f32 %v469, %v480
        %v483 = vlaneseq
        %v484 = vshrl.u32 %v483, 7
        %v485 = vsub.s32 0, %v484
        %v486 = vrot.slane %v459, %v485
        %487 = vrot.lane.b32.xlu0 %v486, 32
        %v488 = vpop.permute.xlu0 %487
        %v490 = vmul.f32 %v481, %v488
        %v492 = vlaneseq
        %v493 = vshrl.u32 %v492, 7
        %v494 = vsub.s32 0, %v493
        %v495 = vrot.slane %v460, %v494
        %496 = vrot.lane.b32.xlu0 %v495, 32
        %v497 = vpop.permute.xlu0 %496
        %v499 = vadd.f32 %v490, %v497
        %501 = vrot.lane.b32.xlu0 %v458, 120
        %v502 = vpop.permute.xlu0 %501
        %504 = vrot.lane.b32.xlu0 %v458, 112
        %v505 = vpop.permute.xlu0 %504
        %507 = vrot.lane.b32.xlu0 %v458, 104
        %v508 = vpop.permute.xlu0 %507
        %v510 = vpack.c.bf16 %v458, %v458
        %v511 = vpack.c.bf16 %v502, %v502
        %v512 = vpack.c.bf16 %v505, %v505
        %v513 = vpack.c.bf16 %v508, %v508
        %515 = vrot.lane.b32.xlu0 %v499, 120
        %v516 = vpop.permute.xlu0 %515
        %518 = vrot.lane.b32.xlu0 %v499, 112
        %v519 = vpop.permute.xlu0 %518
        %521 = vrot.lane.b32.xlu0 %v499, 104
        %v522 = vpop.permute.xlu0 %521
        %v524 = vpack.c.bf16 %v499, %v499
        %v525 = vpack.c.bf16 %v516, %v516
        %v526 = vpack.c.bf16 %v519, %v519
        %v527 = vpack.c.bf16 %v522, %v522
        %528 = vrot.lane.b32.xlu0 %v428, 120
        %v529 = vpop.permute.xlu0 %528
        %531 = vrot.lane.b32.xlu0 %v428, 112
        %v532 = vpop.permute.xlu0 %531
        %534 = vrot.lane.b32.xlu0 %v428, 104
        %v535 = vpop.permute.xlu0 %534
        %v537 = vpack.c.bf16 %v428, %v428
        %v538 = vpack.c.bf16 %v529, %v529
        %v539 = vpack.c.bf16 %v532, %v532
        %v540 = vpack.c.bf16 %v535, %v535
        %542 = vrot.lane.b32.xlu0 %v524, 96
        %v543 = vpop.permute.xlu0 %542
        %vm544 = vcmask 64512
        %v546 = vsel %vm544, %v510, 0
        %v549 = vsel %vm544, %v543, 0
        %551 = vmatprep.subr.bf16.mxu0 0
        %552 = vmatpush1.bf16.xpose.msra.mxu0 0
        %553 = vmatprep.subr.bf16.mxu0 0
        %554 = vmatpush1.bf16.xpose.msra.mxu0 0
        %555 = vmatprep.subr.bf16.mxu0 0
        %556 = vmatpush1.bf16.xpose.msra.mxu0 0
        %557 = vmatprep.subr.bf16.mxu0 0
        %558 = vmatpush1.bf16.xpose.msra.mxu0 0
        %559 = vmatprep.subr.bf16.mxu0 0
        %560 = vmatpush1.bf16.xpose.msra.mxu0 0
        %561 = vmatprep.subr.bf16.mxu0 0
        %562 = vmatpush1.bf16.xpose.msra.mxu0 0
        %563 = vmatprep.subr.bf16.mxu0 0
        %564 = vmatpush1.bf16.xpose.msra.mxu0 0
        %565 = vmatprep.subr.bf16.mxu0 0
        %566 = vmatpush1.bf16.xpose.msra.mxu0 %v549
        %567 = vmatprep.subr.bf16.mxu0 0
        %568 = vmatpush2.bf16.xpose.msra.mxu0 0
        %569 = vmatprep.subr.bf16.mxu0 0
        %570 = vmatpush2.bf16.xpose.msra.mxu0 0
        %571 = vmatprep.subr.bf16.mxu0 0
        %572 = vmatpush2.bf16.xpose.msra.mxu0 0
        %573 = vmatprep.subr.bf16.mxu0 0
        %574 = vmatpush2.bf16.xpose.msra.mxu0 0
        %575 = vmatprep.subr.bf16.mxu0 0
        %576 = vmatpush2.bf16.xpose.msra.mxu0 0
        %577 = vmatprep.subr.bf16.mxu0 0
        %578 = vmatpush2.bf16.xpose.msra.mxu0 0
        %579 = vmatprep.subr.bf16.mxu0 0
        %580 = vmatpush2.bf16.xpose.msra.mxu0 0
        %581 = vmatprep.subr.bf16.mxu0 0
        %582 = vmatpush2.bf16.xpose.msra.mxu0 0
        %583 = vmatprep.mubr.bf16.mxu0 0
        %584 = vmatmul.mubr.bf16.gmra.mxu0 %v546
        %v585 = vpop.f32.mrf.mxu0
        %v586 = vadd.f32 0.0, %v585
        %v587 = vpop.f32.mrf.mxu0
        %v588 = vpop.f32.mrf.mxu0
        %v589 = vpop.f32.mrf.mxu0
        %590 = vdwg.mxu0
        %592 = vrot.lane.b32.xlu0 %v525, 96
        %v593 = vpop.permute.xlu0 %592
        %v595 = vsel %vm544, %v511, 0
        %v598 = vsel %vm544, %v593, 0
        %600 = vmatprep.subr.bf16.mxu0 0
        %601 = vmatpush1.bf16.xpose.msra.mxu0 0
        %602 = vmatprep.subr.bf16.mxu0 0
        %603 = vmatpush1.bf16.xpose.msra.mxu0 0
        %604 = vmatprep.subr.bf16.mxu0 0
        %605 = vmatpush1.bf16.xpose.msra.mxu0 0
        %606 = vmatprep.subr.bf16.mxu0 0
        %607 = vmatpush1.bf16.xpose.msra.mxu0 0
        %608 = vmatprep.subr.bf16.mxu0 0
        %609 = vmatpush1.bf16.xpose.msra.mxu0 0
        %610 = vmatprep.subr.bf16.mxu0 0
        %611 = vmatpush1.bf16.xpose.msra.mxu0 0
        %612 = vmatprep.subr.bf16.mxu0 0
        %613 = vmatpush1.bf16.xpose.msra.mxu0 0
        %614 = vmatprep.subr.bf16.mxu0 0
        %615 = vmatpush1.bf16.xpose.msra.mxu0 %v598
        %616 = vmatprep.subr.bf16.mxu0 0
        %617 = vmatpush2.bf16.xpose.msra.mxu0 0
        %618 = vmatprep.subr.bf16.mxu0 0
        %619 = vmatpush2.bf16.xpose.msra.mxu0 0
        %620 = vmatprep.subr.bf16.mxu0 0
        %621 = vmatpush2.bf16.xpose.msra.mxu0 0
        %622 = vmatprep.subr.bf16.mxu0 0
        %623 = vmatpush2.bf16.xpose.msra.mxu0 0
        %624 = vmatprep.subr.bf16.mxu0 0
        %625 = vmatpush2.bf16.xpose.msra.mxu0 0
        %626 = vmatprep.subr.bf16.mxu0 0
        %627 = vmatpush2.bf16.xpose.msra.mxu0 0
        %628 = vmatprep.subr.bf16.mxu0 0
        %629 = vmatpush2.bf16.xpose.msra.mxu0 0
        %630 = vmatprep.subr.bf16.mxu0 0
        %631 = vmatpush2.bf16.xpose.msra.mxu0 0
        %632 = vmatprep.mubr.bf16.mxu0 0
        %633 = vmatmul.mubr.bf16.gmra.mxu0 %v595
        %v634 = vpop.f32.mrf.mxu0
        %v635 = vadd.f32 0.0, %v634
        %v636 = vpop.f32.mrf.mxu0
        %v637 = vpop.f32.mrf.mxu0
        %v638 = vpop.f32.mrf.mxu0
        %639 = vdwg.mxu0
        %641 = vrot.lane.b32.xlu0 %v526, 96
        %v642 = vpop.permute.xlu0 %641
        %v644 = vsel %vm544, %v512, 0
        %v647 = vsel %vm544, %v642, 0
        %649 = vmatprep.subr.bf16.mxu0 0
        %650 = vmatpush1.bf16.xpose.msra.mxu0 0
        %651 = vmatprep.subr.bf16.mxu0 0
        %652 = vmatpush1.bf16.xpose.msra.mxu0 0
        %653 = vmatprep.subr.bf16.mxu0 0
        %654 = vmatpush1.bf16.xpose.msra.mxu0 0
        %655 = vmatprep.subr.bf16.mxu0 0
        %656 = vmatpush1.bf16.xpose.msra.mxu0 0
        %657 = vmatprep.subr.bf16.mxu0 0
        %658 = vmatpush1.bf16.xpose.msra.mxu0 0
        %659 = vmatprep.subr.bf16.mxu0 0
        %660 = vmatpush1.bf16.xpose.msra.mxu0 0
        %661 = vmatprep.subr.bf16.mxu0 0
        %662 = vmatpush1.bf16.xpose.msra.mxu0 0
        %663 = vmatprep.subr.bf16.mxu0 0
        %664 = vmatpush1.bf16.xpose.msra.mxu0 %v647
        %665 = vmatprep.subr.bf16.mxu0 0
        %666 = vmatpush2.bf16.xpose.msra.mxu0 0
        %667 = vmatprep.subr.bf16.mxu0 0
        %668 = vmatpush2.bf16.xpose.msra.mxu0 0
        %669 = vmatprep.subr.bf16.mxu0 0
        %670 = vmatpush2.bf16.xpose.msra.mxu0 0
        %671 = vmatprep.subr.bf16.mxu0 0
        %672 = vmatpush2.bf16.xpose.msra.mxu0 0
        %673 = vmatprep.subr.bf16.mxu0 0
        %674 = vmatpush2.bf16.xpose.msra.mxu0 0
        %675 = vmatprep.subr.bf16.mxu0 0
        %676 = vmatpush2.bf16.xpose.msra.mxu0 0
        %677 = vmatprep.subr.bf16.mxu0 0
        %678 = vmatpush2.bf16.xpose.msra.mxu0 0
        %679 = vmatprep.subr.bf16.mxu0 0
        %680 = vmatpush2.bf16.xpose.msra.mxu0 0
        %681 = vmatprep.mubr.bf16.mxu0 0
        %682 = vmatmul.mubr.bf16.gmra.mxu0 %v644
        %v683 = vpop.f32.mrf.mxu0
        %v684 = vadd.f32 0.0, %v683
        %v685 = vpop.f32.mrf.mxu0
        %v686 = vpop.f32.mrf.mxu0
        %v687 = vpop.f32.mrf.mxu0
        %688 = vdwg.mxu0
        %690 = vrot.lane.b32.xlu0 %v527, 96
        %v691 = vpop.permute.xlu0 %690
        %v693 = vsel %vm544, %v513, 0
        %v696 = vsel %vm544, %v691, 0
        %698 = vmatprep.subr.bf16.mxu0 0
        %699 = vmatpush1.bf16.xpose.msra.mxu0 0
        %700 = vmatprep.subr.bf16.mxu0 0
        %701 = vmatpush1.bf16.xpose.msra.mxu0 0
        %702 = vmatprep.subr.bf16.mxu0 0
        %703 = vmatpush1.bf16.xpose.msra.mxu0 0
        %704 = vmatprep.subr.bf16.mxu0 0
        %705 = vmatpush1.bf16.xpose.msra.mxu0 0
        %706 = vmatprep.subr.bf16.mxu0 0
        %707 = vmatpush1.bf16.xpose.msra.mxu0 0
        %708 = vmatprep.subr.bf16.mxu0 0
        %709 = vmatpush1.bf16.xpose.msra.mxu0 0
        %710 = vmatprep.subr.bf16.mxu0 0
        %711 = vmatpush1.bf16.xpose.msra.mxu0 0
        %712 = vmatprep.subr.bf16.mxu0 0
        %713 = vmatpush1.bf16.xpose.msra.mxu0 %v696
        %714 = vmatprep.subr.bf16.mxu0 0
        %715 = vmatpush2.bf16.xpose.msra.mxu0 0
        %716 = vmatprep.subr.bf16.mxu0 0
        %717 = vmatpush2.bf16.xpose.msra.mxu0 0
        %718 = vmatprep.subr.bf16.mxu0 0
        %719 = vmatpush2.bf16.xpose.msra.mxu0 0
        %720 = vmatprep.subr.bf16.mxu0 0
        %721 = vmatpush2.bf16.xpose.msra.mxu0 0
        %722 = vmatprep.subr.bf16.mxu0 0
        %723 = vmatpush2.bf16.xpose.msra.mxu0 0
        %724 = vmatprep.subr.bf16.mxu0 0
        %725 = vmatpush2.bf16.xpose.msra.mxu0 0
        %726 = vmatprep.subr.bf16.mxu0 0
        %727 = vmatpush2.bf16.xpose.msra.mxu0 0
        %728 = vmatprep.subr.bf16.mxu0 0
        %729 = vmatpush2.bf16.xpose.msra.mxu0 0
        %730 = vmatprep.mubr.bf16.mxu0 0
        %731 = vmatmul.mubr.bf16.gmra.mxu0 %v693
        %v732 = vpop.f32.mrf.mxu0
        %v733 = vadd.f32 0.0, %v732
        %v734 = vpop.f32.mrf.mxu0
        %v735 = vpop.f32.mrf.mxu0
        %v736 = vpop.f32.mrf.mxu0
        %737 = vdwg.mxu0
        %v738 = vmul.f32 %v586, 0.35355338
        %v739 = vmul.f32 %v635, 0.35355338
        %v740 = vmul.f32 %v684, 0.35355338
        %v741 = vmul.f32 %v733, 0.35355338
        %v742 = vlaneseq
        %v743 = vshrl.u32 %v742, 7
        %v744 = vlaneseq
        %v745 = vand.u32 %v744, 127
        %v746 = vsub.s32 %v745, %v743
        %v747 = vcvt.s32.f32 %v746
        %vm748 = vcmp.le.s32.totalorder %v745, %v743
        %v749 = vsel %vm748, 0.0, -1e+30
        %s750 = sld [smem:[#allocation10]]
        %v751 = vstv %s750
        %v752 = vmul.f32 %v751, %v747
        %s753 = sld [smem:[#allocation10 + $0x1]]
        %v754 = vstv %s753
        %v755 = vmul.f32 %v754, %v747
        %s756 = sld [smem:[#allocation10 + $0x2]]
        %v757 = vstv %s756
        %v758 = vmul.f32 %v757, %v747
        %s759 = sld [smem:[#allocation10 + $0x3]]
        %v760 = vstv %s759
        %v761 = vmul.f32 %v760, %v747
        %v762 = vadd.f32 %v752, %v749
        %v763 = vadd.f32 %v755, %v749
        %v764 = vadd.f32 %v758, %v749
        %v765 = vadd.f32 %v761, %v749
        %v766 = vadd.f32 %v738, %v762
        %v767 = vadd.f32 %v739, %v763
        %v768 = vadd.f32 %v740, %v764
        %v769 = vadd.f32 %v741, %v765
        %v770 = vsel %vm544, %v766, -inf
        %771 = vmax.xlane.f32.xlu0 %v770
        %v772 = vpop.xlane.xlu0 %771
        %v773 = vsel %vm544, %v767, -inf
        %774 = vmax.xlane.f32.xlu0 %v773
        %v775 = vpop.xlane.xlu0 %774
        %v776 = vsel %vm544, %v768, -inf
        %777 = vmax.xlane.f32.xlu0 %v776
        %v778 = vpop.xlane.xlu0 %777
        %v779 = vsel %vm544, %v769, -inf
        %780 = vmax.xlane.f32.xlu0 %v779
        %v781 = vpop.xlane.xlu0 %780
        %v782 = vsub.f32 %v766, %v772
        %v783 = vsub.f32 %v767, %v775
        %v784 = vsub.f32 %v768, %v778
        %v785 = vsub.f32 %v769, %v781
        %v786 = vmul.f32 %v782, 1.442695
        %v787 = vpow.pop %v786
        %v788 = vmul.f32 %v783, 1.442695
        %v789 = vpow.pop %v788
        %v790 = vmul.f32 %v784, 1.442695
        %v791 = vpow.pop %v790
        %v792 = vmul.f32 %v785, 1.442695
        %v793 = vpow.pop %v792
        %v794 = vsel %vm544, %v787, 0.0
        %795 = vadd.xlane.f32.xlu0 %v794
        %v796 = vpop.xlane.xlu0 %795
        %v797 = vsel %vm544, %v789, 0.0
        %798 = vadd.xlane.f32.xlu0 %v797
        %v799 = vpop.xlane.xlu0 %798
        %v800 = vsel %vm544, %v791, 0.0
        %801 = vadd.xlane.f32.xlu0 %v800
        %v802 = vpop.xlane.xlu0 %801
        %v803 = vsel %vm544, %v793, 0.0
        %804 = vadd.xlane.f32.xlu0 %v803
        %v805 = vpop.xlane.xlu0 %804
        %v806 = vrcp.pop %v796
        %v807 = vrcp.pop %v799
        %v808 = vrcp.pop %v802
        %v809 = vrcp.pop %v805
        %v810 = vmul.f32 %v787, %v806
        %v811 = vmul.f32 %v789, %v807
        %v812 = vmul.f32 %v791, %v808
        %v813 = vmul.f32 %v793, %v809
        %v814 = vpack.c.bf16 %v810, %v810
        %v815 = vpack.c.bf16 %v811, %v811
        %v816 = vpack.c.bf16 %v812, %v812
        %v817 = vpack.c.bf16 %v813, %v813
        %819 = vrot.lane.b32.xlu0 %v537, 64
        %v820 = vpop.permute.xlu0 %819
        %v822 = vsel %vm544, %v814, 0
        %vm824 = vcmask 1043456
        %v826 = vsel %vm824, %v820, 0
        %828 = vmatprep.subr.bf16.mxu0 0
        %829 = vmatpush1.bf16.msra.mxu0 0
        %830 = vmatprep.subr.bf16.mxu0 0
        %831 = vmatpush1.bf16.msra.mxu0 0
        %832 = vmatprep.subr.bf16.mxu0 0
        %833 = vmatpush1.bf16.msra.mxu0 0
        %834 = vmatprep.subr.bf16.mxu0 0
        %835 = vmatpush1.bf16.msra.mxu0 0
        %836 = vmatprep.subr.bf16.mxu0 0
        %837 = vmatpush1.bf16.msra.mxu0 0
        %838 = vmatprep.subr.bf16.mxu0 0
        %839 = vmatpush1.bf16.msra.mxu0 0
        %840 = vmatprep.subr.bf16.mxu0 0
        %841 = vmatpush1.bf16.msra.mxu0 0
        %842 = vmatprep.subr.bf16.mxu0 0
        %843 = vmatpush1.bf16.msra.mxu0 %v826
        %844 = vmatprep.subr.bf16.mxu0 0
        %845 = vmatpush2.bf16.msra.mxu0 0
        %846 = vmatprep.subr.bf16.mxu0 0
        %847 = vmatpush2.bf16.msra.mxu0 0
        %848 = vmatprep.subr.bf16.mxu0 0
        %849 = vmatpush2.bf16.msra.mxu0 0
        %850 = vmatprep.subr.bf16.mxu0 0
        %851 = vmatpush2.bf16.msra.mxu0 0
        %852 = vmatprep.subr.bf16.mxu0 0
        %853 = vmatpush2.bf16.msra.mxu0 0
        %854 = vmatprep.subr.bf16.mxu0 0
        %855 = vmatpush2.bf16.msra.mxu0 0
        %856 = vmatprep.subr.bf16.mxu0 0
        %857 = vmatpush2.bf16.msra.mxu0 0
        %858 = vmatprep.subr.bf16.mxu0 0
        %859 = vmatpush2.bf16.msra.mxu0 0
        %860 = vmatprep.mubr.bf16.mxu0 0
        %861 = vmatmul.mubr.bf16.gmra.mxu0 %v822
        %v862 = vpop.f32.mrf.mxu0
        %v863 = vadd.f32 0.0, %v862
        %v864 = vpop.f32.mrf.mxu0
        %v865 = vpop.f32.mrf.mxu0
        %v866 = vpop.f32.mrf.mxu0
        %867 = vdwg.mxu0
        %869 = vrot.lane.b32.xlu0 %v538, 64
        %v870 = vpop.permute.xlu0 %869
        %v872 = vsel %vm544, %v815, 0
        %v875 = vsel %vm824, %v870, 0
        %877 = vmatprep.subr.bf16.mxu0 0
        %878 = vmatpush1.bf16.msra.mxu0 0
        %879 = vmatprep.subr.bf16.mxu0 0
        %880 = vmatpush1.bf16.msra.mxu0 0
        %881 = vmatprep.subr.bf16.mxu0 0
        %882 = vmatpush1.bf16.msra.mxu0 0
        %883 = vmatprep.subr.bf16.mxu0 0
        %884 = vmatpush1.bf16.msra.mxu0 0
        %885 = vmatprep.subr.bf16.mxu0 0
        %886 = vmatpush1.bf16.msra.mxu0 0
        %887 = vmatprep.subr.bf16.mxu0 0
        %888 = vmatpush1.bf16.msra.mxu0 0
        %889 = vmatprep.subr.bf16.mxu0 0
        %890 = vmatpush1.bf16.msra.mxu0 0
        %891 = vmatprep.subr.bf16.mxu0 0
        %892 = vmatpush1.bf16.msra.mxu0 %v875
        %893 = vmatprep.subr.bf16.mxu0 0
        %894 = vmatpush2.bf16.msra.mxu0 0
        %895 = vmatprep.subr.bf16.mxu0 0
        %896 = vmatpush2.bf16.msra.mxu0 0
        %897 = vmatprep.subr.bf16.mxu0 0
        %898 = vmatpush2.bf16.msra.mxu0 0
        %899 = vmatprep.subr.bf16.mxu0 0
        %900 = vmatpush2.bf16.msra.mxu0 0
        %901 = vmatprep.subr.bf16.mxu0 0
        %902 = vmatpush2.bf16.msra.mxu0 0
        %903 = vmatprep.subr.bf16.mxu0 0
        %904 = vmatpush2.bf16.msra.mxu0 0
        %905 = vmatprep.subr.bf16.mxu0 0
        %906 = vmatpush2.bf16.msra.mxu0 0
        %907 = vmatprep.subr.bf16.mxu0 0
        %908 = vmatpush2.bf16.msra.mxu0 0
        %909 = vmatprep.mubr.bf16.mxu0 0
        %910 = vmatmul.mubr.bf16.gmra.mxu0 %v872
        %v911 = vpop.f32.mrf.mxu0
        %v912 = vadd.f32 0.0, %v911
        %v913 = vpop.f32.mrf.mxu0
        %v914 = vpop.f32.mrf.mxu0
        %v915 = vpop.f32.mrf.mxu0
        %916 = vdwg.mxu0
        %918 = vrot.lane.b32.xlu0 %v539, 64
        %v919 = vpop.permute.xlu0 %918
        %v921 = vsel %vm544, %v816, 0
        %v924 = vsel %vm824, %v919, 0
        %926 = vmatprep.subr.bf16.mxu0 0
        %927 = vmatpush1.bf16.msra.mxu0 0
        %928 = vmatprep.subr.bf16.mxu0 0
        %929 = vmatpush1.bf16.msra.mxu0 0
        %930 = vmatprep.subr.bf16.mxu0 0
        %931 = vmatpush1.bf16.msra.mxu0 0
        %932 = vmatprep.subr.bf16.mxu0 0
        %933 = vmatpush1.bf16.msra.mxu0 0
        %934 = vmatprep.subr.bf16.mxu0 0
        %935 = vmatpush1.bf16.msra.mxu0 0
        %936 = vmatprep.subr.bf16.mxu0 0
        %937 = vmatpush1.bf16.msra.mxu0 0
        %938 = vmatprep.subr.bf16.mxu0 0
        %939 = vmatpush1.bf16.msra.mxu0 0
        %940 = vmatprep.subr.bf16.mxu0 0
        %941 = vmatpush1.bf16.msra.mxu0 %v924
        %942 = vmatprep.subr.bf16.mxu0 0
        %943 = vmatpush2.bf16.msra.mxu0 0
        %944 = vmatprep.subr.bf16.mxu0 0
        %945 = vmatpush2.bf16.msra.mxu0 0
        %946 = vmatprep.subr.bf16.mxu0 0
        %947 = vmatpush2.bf16.msra.mxu0 0
        %948 = vmatprep.subr.bf16.mxu0 0
        %949 = vmatpush2.bf16.msra.mxu0 0
        %950 = vmatprep.subr.bf16.mxu0 0
        %951 = vmatpush2.bf16.msra.mxu0 0
        %952 = vmatprep.subr.bf16.mxu0 0
        %953 = vmatpush2.bf16.msra.mxu0 0
        %954 = vmatprep.subr.bf16.mxu0 0
        %955 = vmatpush2.bf16.msra.mxu0 0
        %956 = vmatprep.subr.bf16.mxu0 0
        %957 = vmatpush2.bf16.msra.mxu0 0
        %958 = vmatprep.mubr.bf16.mxu0 0
        %959 = vmatmul.mubr.bf16.gmra.mxu0 %v921
        %v960 = vpop.f32.mrf.mxu0
        %v961 = vadd.f32 0.0, %v960
        %v962 = vpop.f32.mrf.mxu0
        %v963 = vpop.f32.mrf.mxu0
        %v964 = vpop.f32.mrf.mxu0
        %965 = vdwg.mxu0
        %967 = vrot.lane.b32.xlu0 %v540, 64
        %v968 = vpop.permute.xlu0 %967
        %v970 = vsel %vm544, %v817, 0
        %v973 = vsel %vm824, %v968, 0
        %975 = vmatprep.subr.bf16.mxu0 0
        %976 = vmatpush1.bf16.msra.mxu0 0
        %977 = vmatprep.subr.bf16.mxu0 0
        %978 = vmatpush1.bf16.msra.mxu0 0
        %979 = vmatprep.subr.bf16.mxu0 0
        %980 = vmatpush1.bf16.msra.mxu0 0
        %981 = vmatprep.subr.bf16.mxu0 0
        %982 = vmatpush1.bf16.msra.mxu0 0
        %983 = vmatprep.subr.bf16.mxu0 0
        %984 = vmatpush1.bf16.msra.mxu0 0
        %985 = vmatprep.subr.bf16.mxu0 0
        %986 = vmatpush1.bf16.msra.mxu0 0
        %987 = vmatprep.subr.bf16.mxu0 0
        %988 = vmatpush1.bf16.msra.mxu0 0
        %989 = vmatprep.subr.bf16.mxu0 0
        %990 = vmatpush1.bf16.msra.mxu0 %v973
        %991 = vmatprep.subr.bf16.mxu0 0
        %992 = vmatpush2.bf16.msra.mxu0 0
        %993 = vmatprep.subr.bf16.mxu0 0
        %994 = vmatpush2.bf16.msra.mxu0 0
        %995 = vmatprep.subr.bf16.mxu0 0
        %996 = vmatpush2.bf16.msra.mxu0 0
        %997 = vmatprep.subr.bf16.mxu0 0
        %998 = vmatpush2.bf16.msra.mxu0 0
        %999 = vmatprep.subr.bf16.mxu0 0
        %1000 = vmatpush2.bf16.msra.mxu0 0
        %1001 = vmatprep.subr.bf16.mxu0 0
        %1002 = vmatpush2.bf16.msra.mxu0 0
        %1003 = vmatprep.subr.bf16.mxu0 0
        %1004 = vmatpush2.bf16.msra.mxu0 0
        %1005 = vmatprep.subr.bf16.mxu0 0
        %1006 = vmatpush2.bf16.msra.mxu0 0
        %1007 = vmatprep.mubr.bf16.mxu0 0
        %1008 = vmatmul.mubr.bf16.gmra.mxu0 %v970
        %v1009 = vpop.f32.mrf.mxu0
        %v1010 = vadd.f32 0.0, %v1009
        %v1011 = vpop.f32.mrf.mxu0
        %v1012 = vpop.f32.mrf.mxu0
        %v1013 = vpop.f32.mrf.mxu0
        %1014 = vdwg.mxu0
        %1015 = vst.msk [vmem:[#allocation2] sm:$0xff] %vm544, %v863
        %1017 = vrot.lane.b32.xlu0 %v912, 8
        %v1018 = vpop.permute.xlu0 %1017
        %vm1020 = vcmask 130112
        %1021 = vst.msk [vmem:[#allocation2] sm:$0xff] %vm1020, %v1018
        %1023 = vrot.lane.b32.xlu0 %v961, 16
        %v1024 = vpop.permute.xlu0 %1023
        %vm1026 = vcmask 195712
        %1027 = vst.msk [vmem:[#allocation2] sm:$0xff] %vm1026, %v1024
        %1029 = vrot.lane.b32.xlu0 %v1010, 24
        %v1030 = vpop.permute.xlu0 %1029
        %vm1032 = vcmask 261312
        %1033 = vst.msk [vmem:[#allocation2] sm:$0xff] %vm1032, %v1030
        %v1034 = vld [vmem:[#allocation2] sm:$0xff]
        %v1035 = vpack.c.bf16 %v1034, %v1034
        %v1036 = vld [vmem:[#allocation9] sm:$0xf]
        %v1037 = vld [vmem:[#allocation9 + $0x4] sm:$0xf]
        %v1038 = vld [vmem:[#allocation9 + $0x8] sm:$0xf]
        %v1039 = vld [vmem:[#allocation9 + $0xc] sm:$0xf]
        %v1044 = vunpack.c.l.b16 %v1036
        %v1045 = vunpack.c.l.b16 %v1037
        %v1046 = vunpack.c.l.b16 %v1038
        %v1047 = vunpack.c.l.b16 %v1039
        %v1048 = vpack.c.b16 %v1045, %v1044
        %v1049 = vpack.c.b16 %v1047, %v1046
        %v1053 = vsel %vm383, %v1035, 0
        %1055 = vmatprep.subr.bf16.mxu0 0
        %1056 = vmatpush1.bf16.msra.mxu0 0
        %1057 = vmatprep.subr.bf16.mxu0 0
        %1058 = vmatpush1.bf16.msra.mxu0 0
        %1059 = vmatprep.subr.bf16.mxu0 0
        %1060 = vmatpush1.bf16.msra.mxu0 0
        %1061 = vmatprep.subr.bf16.mxu0 0
        %1062 = vmatpush1.bf16.msra.mxu0 0
        %1063 = vmatprep.subr.bf16.mxu0 0
        %1064 = vmatpush1.bf16.msra.mxu0 0
        %1065 = vmatprep.subr.bf16.mxu0 0
        %1066 = vmatpush1.bf16.msra.mxu0 0
        %1067 = vmatprep.subr.bf16.mxu0 0
        %1068 = vmatpush1.bf16.msra.mxu0 %v1049
        %1069 = vmatprep.subr.bf16.mxu0 0
        %1070 = vmatpush1.bf16.msra.mxu0 %v1048
        %1071 = vmatprep.subr.bf16.mxu0 0
        %1072 = vmatpush2.bf16.msra.mxu0 0
        %1073 = vmatprep.subr.bf16.mxu0 0
        %1074 = vmatpush2.bf16.msra.mxu0 0
        %1075 = vmatprep.subr.bf16.mxu0 0
        %1076 = vmatpush2.bf16.msra.mxu0 0
        %1077 = vmatprep.subr.bf16.mxu0 0
        %1078 = vmatpush2.bf16.msra.mxu0 0
        %1079 = vmatprep.subr.bf16.mxu0 0
        %1080 = vmatpush2.bf16.msra.mxu0 0
        %1081 = vmatprep.subr.bf16.mxu0 0
        %1082 = vmatpush2.bf16.msra.mxu0 0
        %1083 = vmatprep.subr.bf16.mxu0 0
        %1084 = vmatpush2.bf16.msra.mxu0 0
        %1085 = vmatprep.subr.bf16.mxu0 0
        %1086 = vmatpush2.bf16.msra.mxu0 0
        %1087 = vmatprep.mubr.bf16.mxu0 0
        %1088 = vmatmul.mubr.bf16.gmra.mxu0 %v1053
        %v1089 = vpop.f32.mrf.mxu0
        %v1090 = vadd.f32 0.0, %v1089
        %v1091 = vpop.f32.mrf.mxu0
        %v1092 = vpop.f32.mrf.mxu0
        %v1093 = vpop.f32.mrf.mxu0
        %1094 = vdwg.mxu0
        %1095 = vst.msk [vmem:[%s363] sm:$0xff] %vm383, %v1090
        %s1096 = sand.u32 %s208, 1
        %s1097 = scalar_lea.sflag [#allocation5], %s1096
        %s1098 = sand.u32 %s208, 1
        %s1099 = smul.addr %s1098, 8
        %s1100 = scalar_lea.vmem [#allocation11], %s1099
        // Predicated region
        $region69: #{tpu_custom_call.1} parent=51 // pred_check
          %p1101 = pneg %p218
        $region70: #{tpu_custom_call.1} parent=51 // pred_check_branch
          %1103 = sbr.rel (%p1101) target = $region72
        $region71: #{tpu_custom_call.1} parent=51 // pred_region
          %s1105 = ssub.s32 128, 128
          %1106 = vsyncadd %s1097, %s1105
          %s1107 = smul.addr %s27, 128
          %s1108 = scalar_lea.hbm %s8, %s1107
          %s1110 = sshll.u32 %s1100, 4
          %s1111 = int_to_ptr.vmem [resolvable:$true] %s1110
          %1113 = dma.vmem_to_hbm [thread:$0]  %s1111, 128, %s1108, %s1097
        $region72: #{tpu_custom_call.1} parent=51 // pred_fallthru
          _
      $region52: #{tpu_custom_call.1} parent=5 // pred_fallthru
        _
      %p1114 = scmp.le.s32.totalorder 2, %s22
      // Predicated region
      $region73: #{tpu_custom_call.1} parent=5 // pred_check
        %p1115 = pneg %p1114
      $region74: #{tpu_custom_call.1} parent=5 // pred_check_branch
        %1117 = sbr.rel (%p1115) target = $region76
      $region75: #{tpu_custom_call.1} parent=5 // pred_region
        %s1118 = ssub.s32 %s22, 2
        // Predicated region
        $region77: #{tpu_custom_call.1} parent=75 // pred_check
          %p1119 = pneg %p224
        $region78: #{tpu_custom_call.1} parent=75 // pred_check_branch
          %1121 = sbr.rel (%p1119) target = $region80
        $region79: #{tpu_custom_call.1} parent=75 // pred_region
          %s1122 = sand.u32 %s209, 1
          %s1123 = scalar_lea.sflag [#allocation5], %s1122
          %s1124 = sand.u32 %s209, 1
          %s1125 = smul.addr %s1124, 8
          %s1126 = scalar_lea.vmem [#allocation11], %s1125
          %1127 = dma.done %s1123, 128
        $region80: #{tpu_custom_call.1} parent=75 // pred_fallthru
          _
      $region76: #{tpu_custom_call.1} parent=5 // pred_fallthru
        _
    $region6: #{tpu_custom_call.1} parent=1 // loop_footer
      %s26 = sadd.s32 1, %s22
    $region7: #{tpu_custom_call.1} parent=1 // loop_footer_branch
      %21 = sbr.rel target = $region3
    $region8: #{tpu_custom_call.1} parent=1 // loop_exit
      _
    %1128 = vsyncpa [#allocation4], 1
    %s1129 = scalar_lea.sflag [#allocation4], 1
    %1130 = vsyncpa %s1129, 1
    %1131 = vsyncpa [#allocation8], 1
    %1132 = vsyncpa [#allocation5], 1
    %s1133 = scalar_lea.sflag [#allocation5], 1
    %1134 = vsyncpa %s1133, 1
    %1135 = vsyncpa [#allocation6], 1
    %s1136 = scalar_lea.sflag [#allocation6], 1
    %1137 = vsyncpa %s1136, 1

</llo_original>
